<compile_context>
chip_gen: v7x
topology: tpu7x:2x2x1
jax: 0.10.0
libtpu: 0.0.40
codegen_flags: <defaults>
</compile_context>

<pallas_src>
import functools
import math

import jax
import jax.numpy as jnp
from jax import lax
from jax.experimental import pallas as pl
from jax.experimental.pallas import tpu as pltpu

_F32 = jnp.float32
_BF16 = jnp.bfloat16


def _layer_norm(v, a, b, eps=1e-6):
    # Annotated-Transformer LayerNorm: a * (x - mean) / (std + eps) + b with
    # unbiased std (N-1 divisor), matching torch.Tensor.std() in the reference.
    d = v.shape[-1]
    mean = jnp.mean(v, axis=-1, keepdims=True)
    centered = v - mean
    var = jnp.sum(centered * centered, axis=-1, keepdims=True) * (1.0 / (d - 1))
    inv = pl.reciprocal(jnp.sqrt(var) + eps, approx=True)
    return a * centered * inv + b


def encoder_layer_kernel(
    x_ref, mask_ref,
    a1_ref, b1_ref,
    wq_ref, bq_ref, wkv_ref, bkv_ref, wo_ref, bo_ref,
    a2_ref, b2_ref,
    w1_ref, bf1_ref, w2_ref, bf2_ref,
    o_ref,
    xn_sc, k_sc, v_sc, ctx_sc,
    *, num_heads: int, q_tile: int,
):
    S, D = x_ref.shape[1], x_ref.shape[2]
    dk = D // num_heads
    t = pl.program_id(1)

    # ------- once per batch: full-seq LayerNorm + fused K|V projection -------
    @pl.when(t == 0)
    def _():
        x_full = x_ref[0].astype(_F32)                           # (S, D)
        xn = _layer_norm(x_full, a1_ref[...], b1_ref[...])        # f32
        xn_bf = xn.astype(_BF16)
        xn_sc[...] = xn_bf                                        # reused by Q path
        kv = jnp.dot(xn_bf, wkv_ref[...],
                     preferred_element_type=_F32) + bkv_ref[...]  # (S, 2D) f32
        k_sc[...] = kv[:, :D].astype(_BF16)
        v_sc[...] = kv[:, D:].astype(_BF16)

    # --------------------------- per query tile ------------------------------
    q_start = pl.multiple_of(t * q_tile, q_tile)
    x_q = x_ref[0, pl.ds(q_start, q_tile), :].astype(_F32)        # residual (TQ, D)
    xn_q = xn_sc[pl.ds(q_start, q_tile), :]                       # bf16    (TQ, D)

    # Q projection; 1/sqrt(dk) already folded into wq/bq by the wrapper.
    q = (jnp.dot(xn_q, wq_ref[...], preferred_element_type=_F32)
         + bq_ref[...]).astype(_BF16)                             # (TQ, D)
    k = k_sc[...]                                                 # (S, D) bf16
    v = v_sc[...]                                                 # (S, D) bf16

    # Additive key mask (0 attend / -1e9 masked), broadcast ONCE per step.
    # Matches masked_fill(mask == 0, -1e9) + softmax for a 0/1 float mask.
    mask = mask_ref[0].astype(_F32)                               # (1, S)
    mask_b = jnp.broadcast_to((mask - 1.0) * 1e9, (q_tile, S))

    # Per-head scores/softmax in f32; contexts land in a bf16 VMEM scratch and
    # are projected with ONE full-width (TQ,D)x(D,D) matmul against wo.
    # TODO(synk): for real dims with small dk (<128) pack heads (head-batched
    # layout) to avoid dk-wide lane slicing / low MXU utilization.
    dims_qk = (((1,), (1,)), ((), ()))    # contract dk with dk -> (TQ, S)
    for h in range(num_heads):
        lo = h * dk
        qh = q[:, lo:lo + dk]
        kh = k[:, lo:lo + dk]
        vh = v[:, lo:lo + dk]
        scores = lax.dot_general(qh, kh, dims_qk,
                                 preferred_element_type=_F32) + mask_b
        m = jnp.max(scores, axis=-1, keepdims=True)
        e = jnp.exp(scores - m)
        p = e * pl.reciprocal(jnp.sum(e, axis=-1, keepdims=True), approx=True)
        ctx_sc[:, lo:lo + dk] = jnp.dot(
            p.astype(_BF16), vh, preferred_element_type=_F32).astype(_BF16)

    attn = jnp.dot(ctx_sc[...], wo_ref[...],
                   preferred_element_type=_F32) + bo_ref[...]
    x1 = x_q + attn                       # residual (dropout = identity)

    # ---------------- sublayer 1: x + feed_forward(norm(x)) ------------------
    xn2 = _layer_norm(x1, a2_ref[...], b2_ref[...])
    h1 = jnp.dot(xn2.astype(_BF16), w1_ref[...],
                 preferred_element_type=_F32) + bf1_ref[...]
    h1 = jnp.maximum(h1, 0.0)
    ff = jnp.dot(h1.astype(_BF16), w2_ref[...],
                 preferred_element_type=_F32) + bf2_ref[...]

    o_ref[0] = (x1 + ff).astype(o_ref.dtype)


def _default_q_tile(S):
    # Bigger tiles amortize per-step overhead (important on v5e/v6e); 256-512
    # is a good default for realistic S.  Falls back to the full sequence.
    for cand in (512, 256, 128):
        if S % cand == 0:
            return cand
    return S


def _vmem_limit_bytes():
    # ~75% of physical VMEM, capped at 96 MiB: ~48 MiB on v7x (64 MiB parts),
    # ~96 MiB on v5e/v6e (128 MiB parts).  Leaves headroom for compiler scratch.
    try:
        cap = int(pltpu.get_tpu_info().vmem_capacity_bytes)
    except Exception:  # hw-info query unavailable: assume the smallest (v7x) part
        cap = 64 * 1024 * 1024
    return min(96 * 1024 * 1024, (cap * 3) // 4)


def _const_spec_kwargs():
    # Grid-invariant blocks (weights / biases / LN params) are fetched once;
    # single-buffer them so weight-sized VMEM is not wasted on double buffering
    # (critical on v7x's 64 MiB).  Only the BlockSpec signature is probed here;
    # genuine lowering / VMEM errors from pallas_call are NOT swallowed.
    try:
        pl.BlockSpec((8, 128), lambda b, t: (0, 0), pipeline_mode=pl.Buffered(1))
        return {"pipeline_mode": pl.Buffered(1)}
    except (TypeError, AttributeError):
        return {}


def encoder_layer(x, mask, params, *, num_heads, q_tile=None):
    B, S, D = x.shape
    assert D % num_heads == 0, "num_heads must divide d_model"
    d_ff = params["w1"].shape[-1]
    if q_tile is None:
        q_tile = _default_q_tile(S)
    assert S % q_tile == 0
    assert q_tile == S or q_tile % 8 == 0, "query tile must be sublane aligned"
    # NOTE: for real model sizes keep D and d_ff multiples of 128 (lane-dense
    # stores / kv split) and q_tile a multiple of 8; demo shapes are tiny.

    dk = D // num_heads
    scale = 1.0 / math.sqrt(dk)

    # Weight fusion / scaling / bf16 cast once in the wrapper (params stay f32,
    # matching the PyTorch module's parameter set).
    wq = (params["wq"] * scale).astype(_BF16)     # fold 1/sqrt(dk) into Q proj
    bq = params["bq"] * scale                     # ... and its bias
    wkv = jnp.concatenate([params["wk"], params["wv"]], axis=-1).astype(_BF16)
    bkv = jnp.concatenate([params["bk"], params["bv"]], axis=-1)
    wo = params["wo"].astype(_BF16)
    w1 = params["w1"].astype(_BF16)
    w2 = params["w2"].astype(_BF16)

    kernel = functools.partial(encoder_layer_kernel,
                               num_heads=num_heads, q_tile=q_tile)

    ck = _const_spec_kwargs()

    def cspec(shape):
        return pl.BlockSpec(shape, lambda b, t: (0,) * len(shape), **ck)

    in_specs = [
        pl.BlockSpec((1, S, D), lambda b, t: (b, 0, 0)),   # x: full seq per batch
        pl.BlockSpec((1, 1, S), lambda b, t: (b, 0, 0)),   # mask (0/1 floats)
        cspec((1, D)), cspec((1, D)),                      # a1, b1
        cspec((D, D)), cspec((1, D)),                      # wq, bq (pre-scaled)
        cspec((D, 2 * D)), cspec((1, 2 * D)),              # wkv, bkv
        cspec((D, D)), cspec((1, D)),                      # wo, bo
        cspec((1, D)), cspec((1, D)),                      # a2, b2
        cspec((D, d_ff)), cspec((1, d_ff)),                # w1, bf1
        cspec((d_ff, D)), cspec((1, D)),                   # w2, bf2
    ]

    # Cost estimate matches the single-pass K/V projection (no per-tile recompute).
    flops = int(2 * B * S * D * (4 * D + 2 * S + 2 * d_ff))
    transcendentals = int(B * num_heads * S * S)
    bytes_accessed = int(
        4 * B * S * D                      # x
        + 4 * B * S                        # mask
        + 4 * B * S * D                    # output
        + 2 * (4 * D * D + 2 * D * d_ff)   # bf16 weights
        + 4 * (9 * D + d_ff)               # f32 biases / LN params (approx)
    )

    return pl.pallas_call(
        kernel,
        out_shape=jax.ShapeDtypeStruct((B, S, D), x.dtype),
        grid_spec=pltpu.PrefetchScalarGridSpec(
            num_scalar_prefetch=0,
            grid=(B, S // q_tile),
            in_specs=in_specs,
            out_specs=pl.BlockSpec((1, q_tile, D), lambda b, t: (b, t, 0)),
            scratch_shapes=[
                pltpu.VMEM((S, D), _BF16),       # LN(x) full sequence
                pltpu.VMEM((S, D), _BF16),       # K (projected, per batch)
                pltpu.VMEM((S, D), _BF16),       # V (projected, per batch)
                pltpu.VMEM((q_tile, D), _BF16),  # per-head attention context
            ],
        ),
        compiler_params=pltpu.CompilerParams(
            # Batch axis "parallel" (v7x megacore shards it across the 2 TCs);
            # query-tile axis "arbitrary" so the per-batch K/V scratch persists
            # across tiles.  TODO(synk): with B == 1 one v7x core idles — split
            # heads or tiles across cores instead in that regime.
            dimension_semantics=("parallel", "arbitrary"),
            vmem_limit_bytes=_vmem_limit_bytes(),
        ),
        cost_estimate=pl.CostEstimate(
            flops=flops,
            transcendentals=transcendentals,
            bytes_accessed=bytes_accessed,
        ),
    )(x, mask,
      params["a1"], params["b1"],
      wq, bq, wkv, bkv, wo, params["bo"],
      params["a2"], params["b2"],
      w1, params["bf1"], w2, params["bf2"])


def encoder_layer_reference(x, mask, params, *, num_heads):
    # Pure-JAX f32 reference of the Annotated-Transformer encoder layer.
    def ln(v, a, b, eps=1e-6):
        mean = jnp.mean(v, axis=-1, keepdims=True)
        var = jnp.sum((v - mean) ** 2, axis=-1, keepdims=True) / (v.shape[-1] - 1)
        return a * (v - mean) / (jnp.sqrt(var) + eps) + b

    B, S, D = x.shape
    dk = D // num_heads
    xn = ln(x, params["a1"], params["b1"])
    q = xn @ params["wq"] + params["bq"]
    k = xn @ params["wk"] + params["bk"]
    v = xn @ params["wv"] + params["bv"]

    def split(t):
        return t.reshape(B, S, num_heads, dk).transpose(0, 2, 1, 3)

    qh, kh, vh = split(q), split(k), split(v)
    scores = jnp.einsum("bhqd,bhkd->bhqk", qh, kh) / math.sqrt(dk)
    scores = jnp.where(mask[:, None, :, :] == 0.0, -1e9, scores)
    p = jax.nn.softmax(scores, axis=-1)
    ctx = jnp.einsum("bhqk,bhkd->bhqd", p, vh).transpose(0, 2, 1, 3).reshape(B, S, D)
    x1 = x + (ctx @ params["wo"] + params["bo"])
    xn2 = ln(x1, params["a2"], params["b2"])
    h1 = jnp.maximum(xn2 @ params["w1"] + params["bf1"], 0.0)
    return x1 + (h1 @ params["w2"] + params["bf2"])


def init_params(key, d_model, d_ff):
    ks = jax.random.split(key, 8)
    s = 1.0 / math.sqrt(d_model)
    sf = 1.0 / math.sqrt(d_ff)
    return {
        "a1": jnp.ones((1, d_model), jnp.float32),
        "b1": jnp.zeros((1, d_model), jnp.float32),
        "wq": jax.random.normal(ks[0], (d_model, d_model), jnp.float32) * s,
        "bq": jnp.zeros((1, d_model), jnp.float32),
        "wk": jax.random.normal(ks[1], (d_model, d_model), jnp.float32) * s,
        "bk": jnp.zeros((1, d_model), jnp.float32),
        "wv": jax.random.normal(ks[2], (d_model, d_model), jnp.float32) * s,
        "bv": jnp.zeros((1, d_model), jnp.float32),
        "wo": jax.random.normal(ks[3], (d_model, d_model), jnp.float32) * s,
        "bo": jnp.zeros((1, d_model), jnp.float32),
        "a2": jnp.ones((1, d_model), jnp.float32),
        "b2": jnp.zeros((1, d_model), jnp.float32),
        "w1": jax.random.normal(ks[4], (d_model, d_ff), jnp.float32) * s,
        "bf1": jnp.zeros((1, d_ff), jnp.float32),
        "w2": jax.random.normal(ks[5], (d_ff, d_model), jnp.float32) * sf,
        "bf2": jnp.zeros((1, d_model), jnp.float32),
    }


if __name__ == "__main__":
    B, S, D, H, D_FF = 2, 8, 32, 4, 64

    key = jax.random.PRNGKey(0)
    kx, kp = jax.random.split(key)
    x = jax.random.normal(kx, (B, S, D), jnp.float32)

    # mask: 1.0 = attend, 0.0 = masked. Mask out last 2 key positions of batch 1.
    mask = jnp.ones((B, 1, S), jnp.float32)
    mask = mask.at[1, 0, S - 2:].set(0.0)

    params = init_params(kp, D, D_FF)

    out = encoder_layer(x, mask, params, num_heads=H)
    out = jax.block_until_ready(out)
    assert out.shape == (B, S, D)
    assert jnp.all(jnp.isfinite(out))

    # Sanity check vs f32 reference (kernel uses bf16 matmuls + approx
    # reciprocals; tolerance accounts for that while catching structural bugs).
    ref = encoder_layer_reference(x, mask, params, num_heads=H)
    err = float(jnp.max(jnp.abs(out - ref)))
    assert err < 0.25, f"max abs error vs reference too large: {err}"

    print("KERNEL_OK")
</pallas_src>

<mosaic_0001>
module attributes {stable_mosaic.version = 11 : i64} {
  func.func @encoder_layer_kernel(%arg0: i32, %arg1: i32, %arg2: memref<1x8x32xf32, #tpu.memory_space<vmem>>, %arg3: memref<1x1x8xf32, #tpu.memory_space<vmem>>, %arg4: memref<1x32xf32, #tpu.memory_space<vmem>>, %arg5: memref<1x32xf32, #tpu.memory_space<vmem>>, %arg6: memref<32x32xbf16, #tpu.memory_space<vmem>>, %arg7: memref<1x32xf32, #tpu.memory_space<vmem>>, %arg8: memref<32x64xbf16, #tpu.memory_space<vmem>>, %arg9: memref<1x64xf32, #tpu.memory_space<vmem>>, %arg10: memref<32x32xbf16, #tpu.memory_space<vmem>>, %arg11: memref<1x32xf32, #tpu.memory_space<vmem>>, %arg12: memref<1x32xf32, #tpu.memory_space<vmem>>, %arg13: memref<1x32xf32, #tpu.memory_space<vmem>>, %arg14: memref<32x64xbf16, #tpu.memory_space<vmem>>, %arg15: memref<1x64xf32, #tpu.memory_space<vmem>>, %arg16: memref<64x32xbf16, #tpu.memory_space<vmem>>, %arg17: memref<1x32xf32, #tpu.memory_space<vmem>>, %arg18: memref<1x8x32xf32, #tpu.memory_space<vmem>>, %arg19: memref<8x32xbf16, #tpu.memory_space<vmem>>, %arg20: memref<8x32xbf16, #tpu.memory_space<vmem>>, %arg21: memref<8x32xbf16, #tpu.memory_space<vmem>>, %arg22: memref<8x32xbf16, #tpu.memory_space<vmem>>) attributes {dimension_semantics = [#tpu.dimension_semantics<parallel>, #tpu.dimension_semantics<arbitrary>], iteration_bounds = array<i64: 2, 1>, scalar_prefetch = 0 : i64, scratch_operands = 4 : i64, tpu.core_type = #tpu.core_type<tc>, window_params = [{transform_indices = @transform_0, window_bounds = array<i64: 1, 8, 32>}, {transform_indices = @transform_1, window_bounds = array<i64: 1, 1, 8>}, {pipeline_mode = #tpu.pipeline_mode<synchronous>, transform_indices = @transform_2, window_bounds = array<i64: 1, 32>}, {pipeline_mode = #tpu.pipeline_mode<synchronous>, transform_indices = @transform_3, window_bounds = array<i64: 1, 32>}, {pipeline_mode = #tpu.pipeline_mode<synchronous>, transform_indices = @transform_4, window_bounds = array<i64: 32, 32>}, {pipeline_mode = #tpu.pipeline_mode<synchronous>, transform_indices = @transform_5, window_bounds = array<i64: 1, 32>}, {pipeline_mode = #tpu.pipeline_mode<synchronous>, transform_indices = @transform_6, window_bounds = array<i64: 32, 64>}, {pipeline_mode = #tpu.pipeline_mode<synchronous>, transform_indices = @transform_7, window_bounds = array<i64: 1, 64>}, {pipeline_mode = #tpu.pipeline_mode<synchronous>, transform_indices = @transform_8, window_bounds = array<i64: 32, 32>}, {pipeline_mode = #tpu.pipeline_mode<synchronous>, transform_indices = @transform_9, window_bounds = array<i64: 1, 32>}, {pipeline_mode = #tpu.pipeline_mode<synchronous>, transform_indices = @transform_10, window_bounds = array<i64: 1, 32>}, {pipeline_mode = #tpu.pipeline_mode<synchronous>, transform_indices = @transform_11, window_bounds = array<i64: 1, 32>}, {pipeline_mode = #tpu.pipeline_mode<synchronous>, transform_indices = @transform_12, window_bounds = array<i64: 32, 64>}, {pipeline_mode = #tpu.pipeline_mode<synchronous>, transform_indices = @transform_13, window_bounds = array<i64: 1, 64>}, {pipeline_mode = #tpu.pipeline_mode<synchronous>, transform_indices = @transform_14, window_bounds = array<i64: 64, 32>}, {pipeline_mode = #tpu.pipeline_mode<synchronous>, transform_indices = @transform_15, window_bounds = array<i64: 1, 32>}, {transform_indices = @transform_16, window_bounds = array<i64: 1, 8, 32>}]} {
    %c0_i32 = arith.constant 0 : i32
    %0 = arith.cmpi eq, %arg1, %c0_i32 : i32
    %1 = arith.extui %0 : i1 to i32
    %c0_i32_0 = arith.constant 0 : i32
    %2 = arith.cmpi ne, %1, %c0_i32_0 : i32
    scf.if %2 {
      %c0_67 = arith.constant 0 : index
      %c0_68 = arith.constant 0 : index
      %c0_69 = arith.constant 0 : index
      %150 = vector.load %arg2[%c0_67, %c0_68, %c0_69] : memref<1x8x32xf32, #tpu.memory_space<vmem>>, vector<1x8x32xf32>
      %151 = vector.shape_cast %150 : vector<1x8x32xf32> to vector<8x32xf32>
      %c0_70 = arith.constant 0 : index
      %c0_71 = arith.constant 0 : index
      %152 = vector.load %arg4[%c0_70, %c0_71] : memref<1x32xf32, #tpu.memory_space<vmem>>, vector<1x32xf32>
      %c0_72 = arith.constant 0 : index
      %c0_73 = arith.constant 0 : index
      %153 = vector.load %arg5[%c0_72, %c0_73] : memref<1x32xf32, #tpu.memory_space<vmem>>, vector<1x32xf32>
      %cst_74 = arith.constant dense<0.000000e+00> : vector<8xf32>
      %154 = vector.multi_reduction <add>, %151, %cst_74 [1] : vector<8x32xf32> to vector<8xf32>
      %155 = vector.shape_cast %154 : vector<8xf32> to vector<8x1xf32>
      %cst_75 = arith.constant 3.200000e+01 : f32
      %156 = vector.broadcast %cst_75 : f32 to vector<8x1xf32>
      %157 = arith.divf %155, %156 : vector<8x1xf32>
      %158 = vector.broadcast %157 : vector<8x1xf32> to vector<8x32xf32>
      %159 = arith.subf %151, %158 : vector<8x32xf32>
      %160 = arith.mulf %159, %159 : vector<8x32xf32>
      %cst_76 = arith.constant dense<0.000000e+00> : vector<8xf32>
      %161 = vector.multi_reduction <add>, %160, %cst_76 [1] : vector<8x32xf32> to vector<8xf32>
      %162 = vector.shape_cast %161 : vector<8xf32> to vector<8x1xf32>
      %cst_77 = arith.constant 0.0322580636 : f32
      %163 = vector.broadcast %cst_77 : f32 to vector<8x1xf32>
      %164 = arith.mulf %162, %163 : vector<8x1xf32>
      %165 = math.sqrt %164 : vector<8x1xf32>
      %cst_78 = arith.constant 9.99999997E-7 : f32
      %166 = vector.broadcast %cst_78 : f32 to vector<8x1xf32>
      %167 = arith.addf %165, %166 : vector<8x1xf32>
      %168 = tpu.reciprocal %167 {approx = true} : vector<8x1xf32> -> vector<8x1xf32>
      %169 = vector.broadcast %152 : vector<1x32xf32> to vector<8x32xf32>
      %170 = arith.mulf %169, %159 : vector<8x32xf32>
      %171 = vector.broadcast %168 : vector<8x1xf32> to vector<8x32xf32>
      %172 = arith.mulf %170, %171 : vector<8x32xf32>
      %173 = vector.broadcast %153 : vector<1x32xf32> to vector<8x32xf32>
      %174 = arith.addf %172, %173 : vector<8x32xf32>
      %175 = arith.truncf %174 : vector<8x32xf32> to vector<8x32xbf16>
      %c0_79 = arith.constant 0 : index
      %c0_80 = arith.constant 0 : index
      %176 = vector.load %arg19[%c0_79, %c0_80] : memref<8x32xbf16, #tpu.memory_space<vmem>>, vector<8x32xbf16>
      tpu.vector_store %arg19[%c0_79, %c0_80], %175 {strides = array<i32>} : memref<8x32xbf16, #tpu.memory_space<vmem>>, vector<8x32xbf16>,
      %c0_81 = arith.constant 0 : index
      %c0_82 = arith.constant 0 : index
      %177 = vector.load %arg8[%c0_81, %c0_82] : memref<32x64xbf16, #tpu.memory_space<vmem>>, vector<32x64xbf16>
      %cst_83 = arith.constant dense<0.000000e+00> : vector<8x64xf32>
      %178 = tpu.matmul %175, %177, %cst_83 {dimension_numbers = #tpu.dot_dimension_numbers<[1], [0], [0], [1], [0, 0, 1, 1], [], []>} : vector<8x32xbf16>, vector<32x64xbf16>, vector<8x64xf32> -> vector<8x64xf32>
      %c0_84 = arith.constant 0 : index
      %c0_85 = arith.constant 0 : index
      %179 = vector.load %arg9[%c0_84, %c0_85] : memref<1x64xf32, #tpu.memory_space<vmem>>, vector<1x64xf32>
      %180 = vector.broadcast %179 : vector<1x64xf32> to vector<8x64xf32>
      %181 = arith.addf %178, %180 : vector<8x64xf32>
      %182 = vector.extract_strided_slice %181 {offsets = [0, 0], sizes = [8, 32], strides = [1, 1]} : vector<8x64xf32> to vector<8x32xf32>
      %183 = arith.truncf %182 : vector<8x32xf32> to vector<8x32xbf16>
      %c0_86 = arith.constant 0 : index
      %c0_87 = arith.constant 0 : index
      %184 = vector.load %arg20[%c0_86, %c0_87] : memref<8x32xbf16, #tpu.memory_space<vmem>>, vector<8x32xbf16>
      tpu.vector_store %arg20[%c0_86, %c0_87], %183 {strides = array<i32>} : memref<8x32xbf16, #tpu.memory_space<vmem>>, vector<8x32xbf16>,
      %185 = vector.extract_strided_slice %181 {offsets = [0, 32], sizes = [8, 32], strides = [1, 1]} : vector<8x64xf32> to vector<8x32xf32>
      %186 = arith.truncf %185 : vector<8x32xf32> to vector<8x32xbf16>
      %c0_88 = arith.constant 0 : index
      %c0_89 = arith.constant 0 : index
      %187 = vector.load %arg21[%c0_88, %c0_89] : memref<8x32xbf16, #tpu.memory_space<vmem>>, vector<8x32xbf16>
      tpu.vector_store %arg21[%c0_88, %c0_89], %186 {strides = array<i32>} : memref<8x32xbf16, #tpu.memory_space<vmem>>, vector<8x32xbf16>,
    } else {
    }
    %c8_i32 = arith.constant 8 : i32
    %3 = arith.muli %arg1, %c8_i32 : i32
    %4 = tpu.assume_multiple %3, 8 : i32
    %c0 = arith.constant 0 : index
    %5 = arith.index_cast %4 : i32 to index
    %c0_1 = arith.constant 0 : index
    %6 = vector.load %arg2[%c0, %5, %c0_1] : memref<1x8x32xf32, #tpu.memory_space<vmem>>, vector<1x8x32xf32>
    %7 = vector.shape_cast %6 : vector<1x8x32xf32> to vector<8x32xf32>
    %8 = arith.index_cast %4 : i32 to index
    %c0_2 = arith.constant 0 : index
    %9 = vector.load %arg19[%8, %c0_2] : memref<8x32xbf16, #tpu.memory_space<vmem>>, vector<8x32xbf16>
    %c0_3 = arith.constant 0 : index
    %c0_4 = arith.constant 0 : index
    %10 = vector.load %arg6[%c0_3, %c0_4] : memref<32x32xbf16, #tpu.memory_space<vmem>>, vector<32x32xbf16>
    %cst = arith.constant dense<0.000000e+00> : vector<8x32xf32>
    %11 = tpu.matmul %9, %10, %cst {dimension_numbers = #tpu.dot_dimension_numbers<[1], [0], [0], [1], [0, 0, 1, 1], [], []>} : vector<8x32xbf16>, vector<32x32xbf16>, vector<8x32xf32> -> vector<8x32xf32>
    %c0_5 = arith.constant 0 : index
    %c0_6 = arith.constant 0 : index
    %12 = vector.load %arg7[%c0_5, %c0_6] : memref<1x32xf32, #tpu.memory_space<vmem>>, vector<1x32xf32>
    %13 = vector.broadcast %12 : vector<1x32xf32> to vector<8x32xf32>
    %14 = arith.addf %11, %13 : vector<8x32xf32>
    %15 = arith.truncf %14 : vector<8x32xf32> to vector<8x32xbf16>
    %c0_7 = arith.constant 0 : index
    %c0_8 = arith.constant 0 : index
    %16 = vector.load %arg20[%c0_7, %c0_8] : memref<8x32xbf16, #tpu.memory_space<vmem>>, vector<8x32xbf16>
    %c0_9 = arith.constant 0 : index
    %c0_10 = arith.constant 0 : index
    %17 = vector.load %arg21[%c0_9, %c0_10] : memref<8x32xbf16, #tpu.memory_space<vmem>>, vector<8x32xbf16>
    %c0_11 = arith.constant 0 : index
    %c0_12 = arith.constant 0 : index
    %c0_13 = arith.constant 0 : index
    %18 = vector.load %arg3[%c0_11, %c0_12, %c0_13] : memref<1x1x8xf32, #tpu.memory_space<vmem>>, vector<1x1x8xf32>
    %19 = vector.shape_cast %18 : vector<1x1x8xf32> to vector<1x8xf32>
    %cst_14 = arith.constant 1.000000e+00 : f32
    %20 = vector.broadcast %cst_14 : f32 to vector<1x8xf32>
    %21 = arith.subf %19, %20 : vector<1x8xf32>
    %cst_15 = arith.constant 1.000000e+09 : f32
    %22 = vector.broadcast %cst_15 : f32 to vector<1x8xf32>
    %23 = arith.mulf %21, %22 : vector<1x8xf32>
    %24 = vector.shape_cast %23 : vector<1x8xf32> to vector<1x8xf32>
    %25 = vector.broadcast %24 : vector<1x8xf32> to vector<8x8xf32>
    %26 = vector.extract_strided_slice %15 {offsets = [0, 0], sizes = [8, 8], strides = [1, 1]} : vector<8x32xbf16> to vector<8x8xbf16>
    %27 = vector.extract_strided_slice %16 {offsets = [0, 0], sizes = [8, 8], strides = [1, 1]} : vector<8x32xbf16> to vector<8x8xbf16>
    %28 = vector.extract_strided_slice %17 {offsets = [0, 0], sizes = [8, 8], strides = [1, 1]} : vector<8x32xbf16> to vector<8x8xbf16>
    %cst_16 = arith.constant dense<0.000000e+00> : vector<8x8xf32>
    %29 = tpu.matmul %26, %27, %cst_16 {dimension_numbers = #tpu.dot_dimension_numbers<[1], [1], [0], [0], [0, 0, 1, 0], [], []>} : vector<8x8xbf16>, vector<8x8xbf16>, vector<8x8xf32> -> vector<8x8xf32>
    %30 = arith.addf %29, %25 : vector<8x8xf32>
    %cst_17 = arith.constant dense<0xFF800000> : vector<8xf32>
    %31 = vector.multi_reduction <maximumf>, %30, %cst_17 [1] : vector<8x8xf32> to vector<8xf32>
    %32 = vector.shape_cast %31 : vector<8xf32> to vector<8x1xf32>
    %33 = vector.broadcast %32 : vector<8x1xf32> to vector<8x8xf32>
    %34 = arith.subf %30, %33 : vector<8x8xf32>
    %35 = math.exp %34 : vector<8x8xf32>
    %cst_18 = arith.constant dense<0.000000e+00> : vector<8xf32>
    %36 = vector.multi_reduction <add>, %35, %cst_18 [1] : vector<8x8xf32> to vector<8xf32>
    %37 = vector.shape_cast %36 : vector<8xf32> to vector<8x1xf32>
    %38 = tpu.reciprocal %37 {approx = true} : vector<8x1xf32> -> vector<8x1xf32>
    %39 = vector.broadcast %38 : vector<8x1xf32> to vector<8x8xf32>
    %40 = arith.mulf %35, %39 : vector<8x8xf32>
    %41 = arith.truncf %40 : vector<8x8xf32> to vector<8x8xbf16>
    %cst_19 = arith.constant dense<0.000000e+00> : vector<8x8xf32>
    %42 = tpu.matmul %41, %28, %cst_19 {dimension_numbers = #tpu.dot_dimension_numbers<[1], [0], [0], [1], [0, 0, 1, 1], [], []>} : vector<8x8xbf16>, vector<8x8xbf16>, vector<8x8xf32> -> vector<8x8xf32>
    %43 = arith.truncf %42 : vector<8x8xf32> to vector<8x8xbf16>
    %c0_20 = arith.constant 0 : index
    %c0_21 = arith.constant 0 : index
    %44 = vector.load %arg22[%c0_20, %c0_21] : memref<8x32xbf16, #tpu.memory_space<vmem>>, vector<8x8xbf16>
    tpu.vector_store %arg22[%c0_20, %c0_21], %43 {strides = array<i32>} : memref<8x32xbf16, #tpu.memory_space<vmem>>, vector<8x8xbf16>,
    %45 = vector.extract_strided_slice %15 {offsets = [0, 8], sizes = [8, 8], strides = [1, 1]} : vector<8x32xbf16> to vector<8x8xbf16>
    %46 = vector.extract_strided_slice %16 {offsets = [0, 8], sizes = [8, 8], strides = [1, 1]} : vector<8x32xbf16> to vector<8x8xbf16>
    %47 = vector.extract_strided_slice %17 {offsets = [0, 8], sizes = [8, 8], strides = [1, 1]} : vector<8x32xbf16> to vector<8x8xbf16>
    %cst_22 = arith.constant dense<0.000000e+00> : vector<8x8xf32>
    %48 = tpu.matmul %45, %46, %cst_22 {dimension_numbers = #tpu.dot_dimension_numbers<[1], [1], [0], [0], [0, 0, 1, 0], [], []>} : vector<8x8xbf16>, vector<8x8xbf16>, vector<8x8xf32> -> vector<8x8xf32>
    %49 = arith.addf %48, %25 : vector<8x8xf32>
    %cst_23 = arith.constant dense<0xFF800000> : vector<8xf32>
    %50 = vector.multi_reduction <maximumf>, %49, %cst_23 [1] : vector<8x8xf32> to vector<8xf32>
    %51 = vector.shape_cast %50 : vector<8xf32> to vector<8x1xf32>
    %52 = vector.broadcast %51 : vector<8x1xf32> to vector<8x8xf32>
    %53 = arith.subf %49, %52 : vector<8x8xf32>
    %54 = math.exp %53 : vector<8x8xf32>
    %cst_24 = arith.constant dense<0.000000e+00> : vector<8xf32>
    %55 = vector.multi_reduction <add>, %54, %cst_24 [1] : vector<8x8xf32> to vector<8xf32>
    %56 = vector.shape_cast %55 : vector<8xf32> to vector<8x1xf32>
    %57 = tpu.reciprocal %56 {approx = true} : vector<8x1xf32> -> vector<8x1xf32>
    %58 = vector.broadcast %57 : vector<8x1xf32> to vector<8x8xf32>
    %59 = arith.mulf %54, %58 : vector<8x8xf32>
    %60 = arith.truncf %59 : vector<8x8xf32> to vector<8x8xbf16>
    %cst_25 = arith.constant dense<0.000000e+00> : vector<8x8xf32>
    %61 = tpu.matmul %60, %47, %cst_25 {dimension_numbers = #tpu.dot_dimension_numbers<[1], [0], [0], [1], [0, 0, 1, 1], [], []>} : vector<8x8xbf16>, vector<8x8xbf16>, vector<8x8xf32> -> vector<8x8xf32>
    %62 = arith.truncf %61 : vector<8x8xf32> to vector<8x8xbf16>
    %c0_26 = arith.constant 0 : index
    %c8 = arith.constant 8 : index
    %63 = vector.load %arg22[%c0_26, %c8] : memref<8x32xbf16, #tpu.memory_space<vmem>>, vector<8x8xbf16>
    tpu.vector_store %arg22[%c0_26, %c8], %62 {strides = array<i32>} : memref<8x32xbf16, #tpu.memory_space<vmem>>, vector<8x8xbf16>,
    %64 = vector.extract_strided_slice %15 {offsets = [0, 16], sizes = [8, 8], strides = [1, 1]} : vector<8x32xbf16> to vector<8x8xbf16>
    %65 = vector.extract_strided_slice %16 {offsets = [0, 16], sizes = [8, 8], strides = [1, 1]} : vector<8x32xbf16> to vector<8x8xbf16>
    %66 = vector.extract_strided_slice %17 {offsets = [0, 16], sizes = [8, 8], strides = [1, 1]} : vector<8x32xbf16> to vector<8x8xbf16>
    %cst_27 = arith.constant dense<0.000000e+00> : vector<8x8xf32>
    %67 = tpu.matmul %64, %65, %cst_27 {dimension_numbers = #tpu.dot_dimension_numbers<[1], [1], [0], [0], [0, 0, 1, 0], [], []>} : vector<8x8xbf16>, vector<8x8xbf16>, vector<8x8xf32> -> vector<8x8xf32>
    %68 = arith.addf %67, %25 : vector<8x8xf32>
    %cst_28 = arith.constant dense<0xFF800000> : vector<8xf32>
    %69 = vector.multi_reduction <maximumf>, %68, %cst_28 [1] : vector<8x8xf32> to vector<8xf32>
    %70 = vector.shape_cast %69 : vector<8xf32> to vector<8x1xf32>
    %71 = vector.broadcast %70 : vector<8x1xf32> to vector<8x8xf32>
    %72 = arith.subf %68, %71 : vector<8x8xf32>
    %73 = math.exp %72 : vector<8x8xf32>
    %cst_29 = arith.constant dense<0.000000e+00> : vector<8xf32>
    %74 = vector.multi_reduction <add>, %73, %cst_29 [1] : vector<8x8xf32> to vector<8xf32>
    %75 = vector.shape_cast %74 : vector<8xf32> to vector<8x1xf32>
    %76 = tpu.reciprocal %75 {approx = true} : vector<8x1xf32> -> vector<8x1xf32>
    %77 = vector.broadcast %76 : vector<8x1xf32> to vector<8x8xf32>
    %78 = arith.mulf %73, %77 : vector<8x8xf32>
    %79 = arith.truncf %78 : vector<8x8xf32> to vector<8x8xbf16>
    %cst_30 = arith.constant dense<0.000000e+00> : vector<8x8xf32>
    %80 = tpu.matmul %79, %66, %cst_30 {dimension_numbers = #tpu.dot_dimension_numbers<[1], [0], [0], [1], [0, 0, 1, 1], [], []>} : vector<8x8xbf16>, vector<8x8xbf16>, vector<8x8xf32> -> vector<8x8xf32>
    %81 = arith.truncf %80 : vector<8x8xf32> to vector<8x8xbf16>
    %c0_31 = arith.constant 0 : index
    %c16 = arith.constant 16 : index
    %82 = vector.load %arg22[%c0_31, %c16] : memref<8x32xbf16, #tpu.memory_space<vmem>>, vector<8x8xbf16>
    tpu.vector_store %arg22[%c0_31, %c16], %81 {strides = array<i32>} : memref<8x32xbf16, #tpu.memory_space<vmem>>, vector<8x8xbf16>,
    %83 = vector.extract_strided_slice %15 {offsets = [0, 24], sizes = [8, 8], strides = [1, 1]} : vector<8x32xbf16> to vector<8x8xbf16>
    %84 = vector.extract_strided_slice %16 {offsets = [0, 24], sizes = [8, 8], strides = [1, 1]} : vector<8x32xbf16> to vector<8x8xbf16>
    %85 = vector.extract_strided_slice %17 {offsets = [0, 24], sizes = [8, 8], strides = [1, 1]} : vector<8x32xbf16> to vector<8x8xbf16>
    %cst_32 = arith.constant dense<0.000000e+00> : vector<8x8xf32>
    %86 = tpu.matmul %83, %84, %cst_32 {dimension_numbers = #tpu.dot_dimension_numbers<[1], [1], [0], [0], [0, 0, 1, 0], [], []>} : vector<8x8xbf16>, vector<8x8xbf16>, vector<8x8xf32> -> vector<8x8xf32>
    %87 = arith.addf %86, %25 : vector<8x8xf32>
    %cst_33 = arith.constant dense<0xFF800000> : vector<8xf32>
    %88 = vector.multi_reduction <maximumf>, %87, %cst_33 [1] : vector<8x8xf32> to vector<8xf32>
    %89 = vector.shape_cast %88 : vector<8xf32> to vector<8x1xf32>
    %90 = vector.broadcast %89 : vector<8x1xf32> to vector<8x8xf32>
    %91 = arith.subf %87, %90 : vector<8x8xf32>
    %92 = math.exp %91 : vector<8x8xf32>
    %cst_34 = arith.constant dense<0.000000e+00> : vector<8xf32>
    %93 = vector.multi_reduction <add>, %92, %cst_34 [1] : vector<8x8xf32> to vector<8xf32>
    %94 = vector.shape_cast %93 : vector<8xf32> to vector<8x1xf32>
    %95 = tpu.reciprocal %94 {approx = true} : vector<8x1xf32> -> vector<8x1xf32>
    %96 = vector.broadcast %95 : vector<8x1xf32> to vector<8x8xf32>
    %97 = arith.mulf %92, %96 : vector<8x8xf32>
    %98 = arith.truncf %97 : vector<8x8xf32> to vector<8x8xbf16>
    %cst_35 = arith.constant dense<0.000000e+00> : vector<8x8xf32>
    %99 = tpu.matmul %98, %85, %cst_35 {dimension_numbers = #tpu.dot_dimension_numbers<[1], [0], [0], [1], [0, 0, 1, 1], [], []>} : vector<8x8xbf16>, vector<8x8xbf16>, vector<8x8xf32> -> vector<8x8xf32>
    %100 = arith.truncf %99 : vector<8x8xf32> to vector<8x8xbf16>
    %c0_36 = arith.constant 0 : index
    %c24 = arith.constant 24 : index
    %101 = vector.load %arg22[%c0_36, %c24] : memref<8x32xbf16, #tpu.memory_space<vmem>>, vector<8x8xbf16>
    tpu.vector_store %arg22[%c0_36, %c24], %100 {strides = array<i32>} : memref<8x32xbf16, #tpu.memory_space<vmem>>, vector<8x8xbf16>,
    %c0_37 = arith.constant 0 : index
    %c0_38 = arith.constant 0 : index
    %102 = vector.load %arg22[%c0_37, %c0_38] : memref<8x32xbf16, #tpu.memory_space<vmem>>, vector<8x32xbf16>
    %c0_39 = arith.constant 0 : index
    %c0_40 = arith.constant 0 : index
    %103 = vector.load %arg10[%c0_39, %c0_40] : memref<32x32xbf16, #tpu.memory_space<vmem>>, vector<32x32xbf16>
    %cst_41 = arith.constant dense<0.000000e+00> : vector<8x32xf32>
    %104 = tpu.matmul %102, %103, %cst_41 {dimension_numbers = #tpu.dot_dimension_numbers<[1], [0], [0], [1], [0, 0, 1, 1], [], []>} : vector<8x32xbf16>, vector<32x32xbf16>, vector<8x32xf32> -> vector<8x32xf32>
    %c0_42 = arith.constant 0 : index
    %c0_43 = arith.constant 0 : index
    %105 = vector.load %arg11[%c0_42, %c0_43] : memref<1x32xf32, #tpu.memory_space<vmem>>, vector<1x32xf32>
    %106 = vector.broadcast %105 : vector<1x32xf32> to vector<8x32xf32>
    %107 = arith.addf %104, %106 : vector<8x32xf32>
    %108 = arith.addf %7, %107 : vector<8x32xf32>
    %c0_44 = arith.constant 0 : index
    %c0_45 = arith.constant 0 : index
    %109 = vector.load %arg12[%c0_44, %c0_45] : memref<1x32xf32, #tpu.memory_space<vmem>>, vector<1x32xf32>
    %c0_46 = arith.constant 0 : index
    %c0_47 = arith.constant 0 : index
    %110 = vector.load %arg13[%c0_46, %c0_47] : memref<1x32xf32, #tpu.memory_space<vmem>>, vector<1x32xf32>
    %cst_48 = arith.constant dense<0.000000e+00> : vector<8xf32>
    %111 = vector.multi_reduction <add>, %108, %cst_48 [1] : vector<8x32xf32> to vector<8xf32>
    %112 = vector.shape_cast %111 : vector<8xf32> to vector<8x1xf32>
    %cst_49 = arith.constant 3.200000e+01 : f32
    %113 = vector.broadcast %cst_49 : f32 to vector<8x1xf32>
    %114 = arith.divf %112, %113 : vector<8x1xf32>
    %115 = vector.broadcast %114 : vector<8x1xf32> to vector<8x32xf32>
    %116 = arith.subf %108, %115 : vector<8x32xf32>
    %117 = arith.mulf %116, %116 : vector<8x32xf32>
    %cst_50 = arith.constant dense<0.000000e+00> : vector<8xf32>
    %118 = vector.multi_reduction <add>, %117, %cst_50 [1] : vector<8x32xf32> to vector<8xf32>
    %119 = vector.shape_cast %118 : vector<8xf32> to vector<8x1xf32>
    %cst_51 = arith.constant 0.0322580636 : f32
    %120 = vector.broadcast %cst_51 : f32 to vector<8x1xf32>
    %121 = arith.mulf %119, %120 : vector<8x1xf32>
    %122 = math.sqrt %121 : vector<8x1xf32>
    %cst_52 = arith.constant 9.99999997E-7 : f32
    %123 = vector.broadcast %cst_52 : f32 to vector<8x1xf32>
    %124 = arith.addf %122, %123 : vector<8x1xf32>
    %125 = tpu.reciprocal %124 {approx = true} : vector<8x1xf32> -> vector<8x1xf32>
    %126 = vector.broadcast %109 : vector<1x32xf32> to vector<8x32xf32>
    %127 = arith.mulf %126, %116 : vector<8x32xf32>
    %128 = vector.broadcast %125 : vector<8x1xf32> to vector<8x32xf32>
    %129 = arith.mulf %127, %128 : vector<8x32xf32>
    %130 = vector.broadcast %110 : vector<1x32xf32> to vector<8x32xf32>
    %131 = arith.addf %129, %130 : vector<8x32xf32>
    %132 = arith.truncf %131 : vector<8x32xf32> to vector<8x32xbf16>
    %c0_53 = arith.constant 0 : index
    %c0_54 = arith.constant 0 : index
    %133 = vector.load %arg14[%c0_53, %c0_54] : memref<32x64xbf16, #tpu.memory_space<vmem>>, vector<32x64xbf16>
    %cst_55 = arith.constant dense<0.000000e+00> : vector<8x64xf32>
    %134 = tpu.matmul %132, %133, %cst_55 {dimension_numbers = #tpu.dot_dimension_numbers<[1], [0], [0], [1], [0, 0, 1, 1], [], []>} : vector<8x32xbf16>, vector<32x64xbf16>, vector<8x64xf32> -> vector<8x64xf32>
    %c0_56 = arith.constant 0 : index
    %c0_57 = arith.constant 0 : index
    %135 = vector.load %arg15[%c0_56, %c0_57] : memref<1x64xf32, #tpu.memory_space<vmem>>, vector<1x64xf32>
    %136 = vector.broadcast %135 : vector<1x64xf32> to vector<8x64xf32>
    %137 = arith.addf %134, %136 : vector<8x64xf32>
    %cst_58 = arith.constant 0.000000e+00 : f32
    %138 = vector.broadcast %cst_58 : f32 to vector<8x64xf32>
    %139 = arith.maximumf %137, %138 : vector<8x64xf32>
    %140 = arith.truncf %139 : vector<8x64xf32> to vector<8x64xbf16>
    %c0_59 = arith.constant 0 : index
    %c0_60 = arith.constant 0 : index
    %141 = vector.load %arg16[%c0_59, %c0_60] : memref<64x32xbf16, #tpu.memory_space<vmem>>, vector<64x32xbf16>
    %cst_61 = arith.constant dense<0.000000e+00> : vector<8x32xf32>
    %142 = tpu.matmul %140, %141, %cst_61 {dimension_numbers = #tpu.dot_dimension_numbers<[1], [0], [0], [1], [0, 0, 1, 1], [], []>} : vector<8x64xbf16>, vector<64x32xbf16>, vector<8x32xf32> -> vector<8x32xf32>
    %c0_62 = arith.constant 0 : index
    %c0_63 = arith.constant 0 : index
    %143 = vector.load %arg17[%c0_62, %c0_63] : memref<1x32xf32, #tpu.memory_space<vmem>>, vector<1x32xf32>
    %144 = vector.broadcast %143 : vector<1x32xf32> to vector<8x32xf32>
    %145 = arith.addf %142, %144 : vector<8x32xf32>
    %146 = arith.addf %108, %145 : vector<8x32xf32>
    %c0_64 = arith.constant 0 : index
    %c0_65 = arith.constant 0 : index
    %c0_66 = arith.constant 0 : index
    %147 = vector.load %arg18[%c0_64, %c0_65, %c0_66] : memref<1x8x32xf32, #tpu.memory_space<vmem>>, vector<1x8x32xf32>
    %148 = vector.shape_cast %147 : vector<1x8x32xf32> to vector<8x32xf32>
    %149 = vector.shape_cast %146 : vector<8x32xf32> to vector<1x8x32xf32>
    tpu.vector_store %arg18[%c0_64, %c0_65, %c0_66], %149 {strides = array<i32>} : memref<1x8x32xf32, #tpu.memory_space<vmem>>, vector<1x8x32xf32>,
    return
  }
  func.func @transform_0(%arg0: i32, %arg1: i32) -> (i32, i32, i32) {
    %c0_i32 = arith.constant 0 : i32
    %c0_i32_0 = arith.constant 0 : i32
    %c0_i32_1 = arith.constant 0 : i32
    return %arg0, %c0_i32, %c0_i32_0 : i32, i32, i32
  }
  func.func @transform_1(%arg0: i32, %arg1: i32) -> (i32, i32, i32) {
    %c0_i32 = arith.constant 0 : i32
    %c0_i32_0 = arith.constant 0 : i32
    %c0_i32_1 = arith.constant 0 : i32
    return %arg0, %c0_i32, %c0_i32_0 : i32, i32, i32
  }
  func.func @transform_2(%arg0: i32, %arg1: i32) -> (i32, i32) {
    %c0_i32 = arith.constant 0 : i32
    %c0_i32_0 = arith.constant 0 : i32
    %c0_i32_1 = arith.constant 0 : i32
    return %c0_i32, %c0_i32_0 : i32, i32
  }
  func.func @transform_3(%arg0: i32, %arg1: i32) -> (i32, i32) {
    %c0_i32 = arith.constant 0 : i32
    %c0_i32_0 = arith.constant 0 : i32
    %c0_i32_1 = arith.constant 0 : i32
    return %c0_i32, %c0_i32_0 : i32, i32
  }
  func.func @transform_4(%arg0: i32, %arg1: i32) -> (i32, i32) {
    %c0_i32 = arith.constant 0 : i32
    %c0_i32_0 = arith.constant 0 : i32
    %c0_i32_1 = arith.constant 0 : i32
    return %c0_i32, %c0_i32_0 : i32, i32
  }
  func.func @transform_5(%arg0: i32, %arg1: i32) -> (i32, i32) {
    %c0_i32 = arith.constant 0 : i32
    %c0_i32_0 = arith.constant 0 : i32
    %c0_i32_1 = arith.constant 0 : i32
    return %c0_i32, %c0_i32_0 : i32, i32
  }
  func.func @transform_6(%arg0: i32, %arg1: i32) -> (i32, i32) {
    %c0_i32 = arith.constant 0 : i32
    %c0_i32_0 = arith.constant 0 : i32
    %c0_i32_1 = arith.constant 0 : i32
    return %c0_i32, %c0_i32_0 : i32, i32
  }
  func.func @transform_7(%arg0: i32, %arg1: i32) -> (i32, i32) {
    %c0_i32 = arith.constant 0 : i32
    %c0_i32_0 = arith.constant 0 : i32
    %c0_i32_1 = arith.constant 0 : i32
    return %c0_i32, %c0_i32_0 : i32, i32
  }
  func.func @transform_8(%arg0: i32, %arg1: i32) -> (i32, i32) {
    %c0_i32 = arith.constant 0 : i32
    %c0_i32_0 = arith.constant 0 : i32
    %c0_i32_1 = arith.constant 0 : i32
    return %c0_i32, %c0_i32_0 : i32, i32
  }
  func.func @transform_9(%arg0: i32, %arg1: i32) -> (i32, i32) {
    %c0_i32 = arith.constant 0 : i32
    %c0_i32_0 = arith.constant 0 : i32
    %c0_i32_1 = arith.constant 0 : i32
    return %c0_i32, %c0_i32_0 : i32, i32
  }
  func.func @transform_10(%arg0: i32, %arg1: i32) -> (i32, i32) {
    %c0_i32 = arith.constant 0 : i32
    %c0_i32_0 = arith.constant 0 : i32
    %c0_i32_1 = arith.constant 0 : i32
    return %c0_i32, %c0_i32_0 : i32, i32
  }
  func.func @transform_11(%arg0: i32, %arg1: i32) -> (i32, i32) {
    %c0_i32 = arith.constant 0 : i32
    %c0_i32_0 = arith.constant 0 : i32
    %c0_i32_1 = arith.constant 0 : i32
    return %c0_i32, %c0_i32_0 : i32, i32
  }
  func.func @transform_12(%arg0: i32, %arg1: i32) -> (i32, i32) {
    %c0_i32 = arith.constant 0 : i32
    %c0_i32_0 = arith.constant 0 : i32
    %c0_i32_1 = arith.constant 0 : i32
    return %c0_i32, %c0_i32_0 : i32, i32
  }
  func.func @transform_13(%arg0: i32, %arg1: i32) -> (i32, i32) {
    %c0_i32 = arith.constant 0 : i32
    %c0_i32_0 = arith.constant 0 : i32
    %c0_i32_1 = arith.constant 0 : i32
    return %c0_i32, %c0_i32_0 : i32, i32
  }
  func.func @transform_14(%arg0: i32, %arg1: i32) -> (i32, i32) {
    %c0_i32 = arith.constant 0 : i32
    %c0_i32_0 = arith.constant 0 : i32
    %c0_i32_1 = arith.constant 0 : i32
    return %c0_i32, %c0_i32_0 : i32, i32
  }
  func.func @transform_15(%arg0: i32, %arg1: i32) -> (i32, i32) {
    %c0_i32 = arith.constant 0 : i32
    %c0_i32_0 = arith.constant 0 : i32
    %c0_i32_1 = arith.constant 0 : i32
    return %c0_i32, %c0_i32_0 : i32, i32
  }
  func.func @transform_16(%arg0: i32, %arg1: i32) -> (i32, i32, i32) {
    %c0_i32 = arith.constant 0 : i32
    %c0_i32_0 = arith.constant 0 : i32
    return %arg0, %arg1, %c0_i32 : i32, i32, i32
  }
}

</mosaic_0001>

<llo_original>
// kernel: tpu_custom_call.1
$region0: #{tpu_custom_call.1}
  #allocation0 [shape = 'u32[]', space=smem, size = 0x4, offset = 0x4, fixed_abs, tag = 'smem constant byte address 0x4 - core index']
  #allocation1 [shape = 'u32[144,128]{1,0:T(1,128)}', space=vmem, size = 0x12000, scoped, tag = 'internal scratch']
  #allocation2 [shape = 'bf16[8,32]{1,0:T(8,128)(2,1)}', space=vmem, size = 0x800, scoped, tag = 'scratch operand']
  #allocation3 [shape = 'bf16[8,32]{1,0:T(8,128)(2,1)}', space=vmem, size = 0x800, scoped, tag = 'scratch operand']
  #allocation4 [shape = 'bf16[8,32]{1,0:T(8,128)(2,1)}', space=vmem, size = 0x800, scoped, tag = 'scratch operand']
  #allocation5 [shape = 'bf16[8,32]{1,0:T(8,128)(2,1)}', space=vmem, size = 0x800, scoped, tag = 'scratch operand']
  %s0 = inlined_call_operand.vmem [shape: f32[2,8,32], index: 0, kind: input, shape index: {}]
  %s1 = inlined_call_operand.vmem [shape: f32[2,1,8], index: 1, kind: input, shape index: {}]
  %s2 = inlined_call_operand.hbm [shape: f32[1,32], index: 2, kind: input, shape index: {}]
  %s3 = inlined_call_operand.hbm [shape: f32[1,32], index: 3, kind: input, shape index: {}]
  %s4 = inlined_call_operand.vmem [shape: bf16[32,32], index: 4, kind: input, shape index: {}]
  %s5 = inlined_call_operand.hbm [shape: f32[1,32], index: 5, kind: input, shape index: {}]
  %s6 = inlined_call_operand.vmem [shape: bf16[32,64], index: 6, kind: input, shape index: {}]
  %s7 = inlined_call_operand.hbm [shape: f32[1,64], index: 7, kind: input, shape index: {}]
  %s8 = inlined_call_operand.hbm [shape: bf16[32,32], index: 8, kind: input, shape index: {}]
  %s9 = inlined_call_operand.hbm [shape: f32[1,32], index: 9, kind: input, shape index: {}]
  %s10 = inlined_call_operand.vmem [shape: f32[1,32], index: 10, kind: input, shape index: {}]
  %s11 = inlined_call_operand.vmem [shape: f32[1,32], index: 11, kind: input, shape index: {}]
  %s12 = inlined_call_operand.vmem [shape: bf16[32,64], index: 12, kind: input, shape index: {}]
  %s13 = inlined_call_operand.vmem [shape: f32[1,64], index: 13, kind: input, shape index: {}]
  %s14 = inlined_call_operand.vmem [shape: bf16[64,32], index: 14, kind: input, shape index: {}]
  %s15 = inlined_call_operand.vmem [shape: f32[1,32], index: 15, kind: input, shape index: {}]
  %s16 = inlined_call_operand.hbm [shape: f32[2,8,32], index: 16, kind: output, shape index: {}]
  %s17 = sld [smem:[#allocation0]]
  $region125: #{tpu_custom_call.1} parent=0
    _
  %s19 = ssub.s32 1, %s17
  %s20 = scalar_select 0, %s19, %s17
  $region1: #{tpu_custom_call.1} parent=0
    #allocation6 [shape = 'u8[512]{0}', space=vmem, size = 0x400, scoped, tag = 'input window, operand 2, single buffered']
    #allocation7 [shape = 's32[2]{0}', space=sflag, size = 0x8, scoped, tag = 'scoped memory for tpu_custom_call.1']
    #allocation8 [shape = 's32[2]{0}', space=sflag, size = 0x8, scoped, tag = 'scoped memory for tpu_custom_call.1']
    #allocation9 [shape = 'u8[512]{0}', space=vmem, size = 0x400, scoped, tag = 'input window, operand 3, single buffered']
    #allocation10 [shape = 's32[1]{0}', space=sflag, size = 0x4, scoped, tag = 'scoped memory for tpu_custom_call.1']
    #allocation11 [shape = 'u8[512]{0}', space=vmem, size = 0x400, scoped, tag = 'input window, operand 5, single buffered']
    #allocation12 [shape = 'u8[512]{0}', space=vmem, size = 0x400, scoped, tag = 'input window, operand 7, single buffered']
    #allocation13 [shape = 's32[1]{0}', space=sflag, size = 0x4, scoped, tag = 'scoped memory for tpu_custom_call.1']
    #allocation14 [shape = 'u8[8192]{0}', space=vmem, size = 0x2000, scoped, tag = 'input window, operand 8, single buffered']
    #allocation15 [shape = 'u8[512]{0}', space=vmem, size = 0x400, scoped, tag = 'input window, operand 9, single buffered']
    #allocation16 [shape = 's32[1]{0}', space=sflag, size = 0x4, scoped, tag = 'scoped memory for tpu_custom_call.1']
    #allocation17 [shape = 'u8[8192]{0}', space=vmem, size = 0x2000, scoped, tag = 'output window, operand 0']
    %21 = vsyncpa [#allocation7], 0
    %22 = vsyncpa [#allocation10], 0
    %23 = vsyncpa [#allocation13], 0
    %24 = vsyncpa [#allocation16], 0
    %25 = vsyncpa [#allocation8], 0
    %s26 = scalar_lea.sflag [#allocation8], 1
    %27 = vsyncpa %s26, 0
    loop: start=0, step=1, limit=4
    $region2: #{tpu_custom_call.1} parent=1 // loop_pre_header
      _
    $region3: #{tpu_custom_call.1} parent=1 // loop_header
      %s29 = sphi 0, %s33
      %p30 = scmp.ge.s32.totalorder %s29, 4
      %s36 = sphi 0, %s48
      %s37 = sphi 0, %s44
      %s38 = sphi 0, %s36
      %s39 = sphi 0, %s37
      %s40 = sphi 0, %s38
      %s41 = sphi 0, %s39
      %s51 = sphi 0, %s53
      %s54 = sphi 0, %s51
      %s55 = sphi 0, %s54
      %s71 = sphi 0, %s55
      %s77 = sphi 0, %s79
      %s80 = sphi 0, %s77
      %s81 = sphi 0, %s80
      %s97 = sphi 0, %s81
      %s101 = sphi 0, %s101
      %s103 = sphi 0, %s101
      %s104 = sphi 0, %s103
      %s118 = sphi 0, %s104
      %s122 = sphi 0, %s122
      %s124 = sphi 0, %s122
      %s125 = sphi 0, %s124
      %s139 = sphi 0, %s125
      %s143 = sphi 0, %s143
      %s145 = sphi 0, %s143
      %s146 = sphi 0, %s145
      %s160 = sphi 0, %s146
      %s164 = sphi 0, %s164
      %s166 = sphi 0, %s164
      %s167 = sphi 0, %s166
      %s181 = sphi 0, %s167
      %s185 = sphi 0, %s185
      %s187 = sphi 0, %s185
      %s188 = sphi 0, %s187
      %s202 = sphi 0, %s188
      %s206 = sphi 0, %s206
      %s208 = sphi 0, %s206
      %s209 = sphi 0, %s208
      %s223 = sphi 0, %s209
      %s227 = sphi 0, %s227
      %s229 = sphi 0, %s227
      %s230 = sphi 0, %s229
      %s244 = sphi 0, %s230
      %s248 = sphi 0, %s248
      %s250 = sphi 0, %s248
      %s251 = sphi 0, %s250
      %s265 = sphi 0, %s251
      %s269 = sphi 0, %s269
      %s271 = sphi 0, %s269
      %s272 = sphi 0, %s271
      %s286 = sphi 0, %s272
      %s290 = sphi 0, %s290
      %s292 = sphi 0, %s290
      %s293 = sphi 0, %s292
      %s307 = sphi 0, %s293
      %s311 = sphi 0, %s311
      %s313 = sphi 0, %s311
      %s314 = sphi 0, %s313
      %s328 = sphi 0, %s314
      %s332 = sphi 0, %s332
      %s334 = sphi 0, %s332
      %s335 = sphi 0, %s334
      %s349 = sphi 0, %s335
      %s353 = sphi 0, %s353
      %s355 = sphi 0, %s353
      %s356 = sphi 0, %s355
      %s370 = sphi 0, %s356
      %s374 = sphi 0, %s374
      %s376 = sphi 0, %s374
      %s377 = sphi 0, %s376
      %s391 = sphi 0, %s377
      %s399 = sphi 0, %s401
      %s402 = sphi 0, %s399
      %s403 = sphi 0, %s402
      %s419 = sphi 0, %s403
    $region4: #{tpu_custom_call.1} parent=1 // loop_header_branch
      %32 = sbr.rel (%p30) target = $region8
    $region5: #{tpu_custom_call.1} parent=1 // loop_body
      %s34 = ssub.s32 %s29, 1
      %s35 = ssub.s32 %s29, 2
      %s42 = sadd.s32 1, %s37
      %p43 = scmp.ge.s32.totalorder %s42, 1
      %s44 = scalar_select %p43, 0, %s42
      %s45 = sadd.s32 1, %s36
      %s46 = scalar_select %p43, %s45, %s36
      %p47 = scmp.ge.s32.totalorder %s46, 2
      %s48 = scalar_select %p47, 0, %s46
      %s49 = ssub.s32 %s36, %s48
      %p50 = scmp.eq.s32.totalorder %s49, 0
      %s52 = sadd.s32 %s51, 1
      %s53 = scalar_select %p50, %s51, %s52
      %p56 = pneg %p50
      %p57 = scmp.eq.s32.totalorder %s29, 1
      %p58 = por %p56, %p57
      %p59 = scmp.ne.s32.totalorder %s51, %s54
      %p60 = scmp.eq.s32.totalorder %s29, 0
      %p61 = por %p59, %p60
      %p62 = scmp.ne.s32.totalorder %s51, %s54
      %p63 = scmp.eq.s32.totalorder %s34, 1
      %p64 = por %p62, %p63
      %p65 = scmp.ne.s32.totalorder %s54, %s55
      %p66 = scmp.eq.s32.totalorder %s34, 0
      %p67 = por %p65, %p66
      %p68 = scmp.ne.s32.totalorder %s54, %s55
      %p69 = scmp.eq.s32.totalorder %s35, 1
      %p70 = por %p68, %p69
      %p72 = scmp.ne.s32.totalorder %s55, %s71
      %p73 = scmp.eq.s32.totalorder %s35, 0
      %p74 = por %p72, %p73
      %s75 = ssub.s32 %s36, %s48
      %p76 = scmp.eq.s32.totalorder %s75, 0
      %s78 = sadd.s32 %s77, 1
      %s79 = scalar_select %p76, %s77, %s78
      %p82 = pneg %p76
      %p83 = scmp.eq.s32.totalorder %s29, 1
      %p84 = por %p82, %p83
      %p85 = scmp.ne.s32.totalorder %s77, %s80
      %p86 = scmp.eq.s32.totalorder %s29, 0
      %p87 = por %p85, %p86
      %p88 = scmp.ne.s32.totalorder %s77, %s80
      %p89 = scmp.eq.s32.totalorder %s34, 1
      %p90 = por %p88, %p89
      %p91 = scmp.ne.s32.totalorder %s80, %s81
      %p92 = scmp.eq.s32.totalorder %s34, 0
      %p93 = por %p91, %p92
      %p94 = scmp.ne.s32.totalorder %s80, %s81
      %p95 = scmp.eq.s32.totalorder %s35, 1
      %p96 = por %p94, %p95
      %p98 = scmp.ne.s32.totalorder %s81, %s97
      %p99 = scmp.eq.s32.totalorder %s35, 0
      %p100 = por %p98, %p99
      %s102 = sadd.s32 %s101, 1
      %p105 = scmp.eq.s32.totalorder %s29, 1
      %p106 = scmp.ne.s32.totalorder %s101, %s103
      %p107 = scmp.eq.s32.totalorder %s29, 0
      %p108 = por %p106, %p107
      %p109 = scmp.ne.s32.totalorder %s101, %s103
      %p110 = scmp.eq.s32.totalorder %s34, 1
      %p111 = por %p109, %p110
      %p112 = scmp.ne.s32.totalorder %s103, %s104
      %p113 = scmp.eq.s32.totalorder %s34, 0
      %p114 = por %p112, %p113
      %p115 = scmp.ne.s32.totalorder %s103, %s104
      %p116 = scmp.eq.s32.totalorder %s35, 1
      %p117 = por %p115, %p116
      %p119 = scmp.ne.s32.totalorder %s104, %s118
      %p120 = scmp.eq.s32.totalorder %s35, 0
      %p121 = por %p119, %p120
      %s123 = sadd.s32 %s122, 1
      %p126 = scmp.eq.s32.totalorder %s29, 1
      %p127 = scmp.ne.s32.totalorder %s122, %s124
      %p128 = scmp.eq.s32.totalorder %s29, 0
      %p129 = por %p127, %p128
      %p130 = scmp.ne.s32.totalorder %s122, %s124
      %p131 = scmp.eq.s32.totalorder %s34, 1
      %p132 = por %p130, %p131
      %p133 = scmp.ne.s32.totalorder %s124, %s125
      %p134 = scmp.eq.s32.totalorder %s34, 0
      %p135 = por %p133, %p134
      %p136 = scmp.ne.s32.totalorder %s124, %s125
      %p137 = scmp.eq.s32.totalorder %s35, 1
      %p138 = por %p136, %p137
      %p140 = scmp.ne.s32.totalorder %s125, %s139
      %p141 = scmp.eq.s32.totalorder %s35, 0
      %p142 = por %p140, %p141
      %s144 = sadd.s32 %s143, 1
      %p147 = scmp.eq.s32.totalorder %s29, 1
      %p148 = scmp.ne.s32.totalorder %s143, %s145
      %p149 = scmp.eq.s32.totalorder %s29, 0
      %p150 = por %p148, %p149
      %p151 = scmp.ne.s32.totalorder %s143, %s145
      %p152 = scmp.eq.s32.totalorder %s34, 1
      %p153 = por %p151, %p152
      %p154 = scmp.ne.s32.totalorder %s145, %s146
      %p155 = scmp.eq.s32.totalorder %s34, 0
      %p156 = por %p154, %p155
      %p157 = scmp.ne.s32.totalorder %s145, %s146
      %p158 = scmp.eq.s32.totalorder %s35, 1
      %p159 = por %p157, %p158
      %p161 = scmp.ne.s32.totalorder %s146, %s160
      %p162 = scmp.eq.s32.totalorder %s35, 0
      %p163 = por %p161, %p162
      %s165 = sadd.s32 %s164, 1
      %p168 = scmp.eq.s32.totalorder %s29, 1
      %p169 = scmp.ne.s32.totalorder %s164, %s166
      %p170 = scmp.eq.s32.totalorder %s29, 0
      %p171 = por %p169, %p170
      %p172 = scmp.ne.s32.totalorder %s164, %s166
      %p173 = scmp.eq.s32.totalorder %s34, 1
      %p174 = por %p172, %p173
      %p175 = scmp.ne.s32.totalorder %s166, %s167
      %p176 = scmp.eq.s32.totalorder %s34, 0
      %p177 = por %p175, %p176
      %p178 = scmp.ne.s32.totalorder %s166, %s167
      %p179 = scmp.eq.s32.totalorder %s35, 1
      %p180 = por %p178, %p179
      %p182 = scmp.ne.s32.totalorder %s167, %s181
      %p183 = scmp.eq.s32.totalorder %s35, 0
      %p184 = por %p182, %p183
      %s186 = sadd.s32 %s185, 1
      %p189 = scmp.eq.s32.totalorder %s29, 1
      %p190 = scmp.ne.s32.totalorder %s185, %s187
      %p191 = scmp.eq.s32.totalorder %s29, 0
      %p192 = por %p190, %p191
      %p193 = scmp.ne.s32.totalorder %s185, %s187
      %p194 = scmp.eq.s32.totalorder %s34, 1
      %p195 = por %p193, %p194
      %p196 = scmp.ne.s32.totalorder %s187, %s188
      %p197 = scmp.eq.s32.totalorder %s34, 0
      %p198 = por %p196, %p197
      %p199 = scmp.ne.s32.totalorder %s187, %s188
      %p200 = scmp.eq.s32.totalorder %s35, 1
      %p201 = por %p199, %p200
      %p203 = scmp.ne.s32.totalorder %s188, %s202
      %p204 = scmp.eq.s32.totalorder %s35, 0
      %p205 = por %p203, %p204
      %s207 = sadd.s32 %s206, 1
      %p210 = scmp.eq.s32.totalorder %s29, 1
      %p211 = scmp.ne.s32.totalorder %s206, %s208
      %p212 = scmp.eq.s32.totalorder %s29, 0
      %p213 = por %p211, %p212
      %p214 = scmp.ne.s32.totalorder %s206, %s208
      %p215 = scmp.eq.s32.totalorder %s34, 1
      %p216 = por %p214, %p215
      %p217 = scmp.ne.s32.totalorder %s208, %s209
      %p218 = scmp.eq.s32.totalorder %s34, 0
      %p219 = por %p217, %p218
      %p220 = scmp.ne.s32.totalorder %s208, %s209
      %p221 = scmp.eq.s32.totalorder %s35, 1
      %p222 = por %p220, %p221
      %p224 = scmp.ne.s32.totalorder %s209, %s223
      %p225 = scmp.eq.s32.totalorder %s35, 0
      %p226 = por %p224, %p225
      %s228 = sadd.s32 %s227, 1
      %p231 = scmp.eq.s32.totalorder %s29, 1
      %p232 = scmp.ne.s32.totalorder %s227, %s229
      %p233 = scmp.eq.s32.totalorder %s29, 0
      %p234 = por %p232, %p233
      %p235 = scmp.ne.s32.totalorder %s227, %s229
      %p236 = scmp.eq.s32.totalorder %s34, 1
      %p237 = por %p235, %p236
      %p238 = scmp.ne.s32.totalorder %s229, %s230
      %p239 = scmp.eq.s32.totalorder %s34, 0
      %p240 = por %p238, %p239
      %p241 = scmp.ne.s32.totalorder %s229, %s230
      %p242 = scmp.eq.s32.totalorder %s35, 1
      %p243 = por %p241, %p242
      %p245 = scmp.ne.s32.totalorder %s230, %s244
      %p246 = scmp.eq.s32.totalorder %s35, 0
      %p247 = por %p245, %p246
      %s249 = sadd.s32 %s248, 1
      %p252 = scmp.eq.s32.totalorder %s29, 1
      %p253 = scmp.ne.s32.totalorder %s248, %s250
      %p254 = scmp.eq.s32.totalorder %s29, 0
      %p255 = por %p253, %p254
      %p256 = scmp.ne.s32.totalorder %s248, %s250
      %p257 = scmp.eq.s32.totalorder %s34, 1
      %p258 = por %p256, %p257
      %p259 = scmp.ne.s32.totalorder %s250, %s251
      %p260 = scmp.eq.s32.totalorder %s34, 0
      %p261 = por %p259, %p260
      %p262 = scmp.ne.s32.totalorder %s250, %s251
      %p263 = scmp.eq.s32.totalorder %s35, 1
      %p264 = por %p262, %p263
      %p266 = scmp.ne.s32.totalorder %s251, %s265
      %p267 = scmp.eq.s32.totalorder %s35, 0
      %p268 = por %p266, %p267
      %s270 = sadd.s32 %s269, 1
      %p273 = scmp.eq.s32.totalorder %s29, 1
      %p274 = scmp.ne.s32.totalorder %s269, %s271
      %p275 = scmp.eq.s32.totalorder %s29, 0
      %p276 = por %p274, %p275
      %p277 = scmp.ne.s32.totalorder %s269, %s271
      %p278 = scmp.eq.s32.totalorder %s34, 1
      %p279 = por %p277, %p278
      %p280 = scmp.ne.s32.totalorder %s271, %s272
      %p281 = scmp.eq.s32.totalorder %s34, 0
      %p282 = por %p280, %p281
      %p283 = scmp.ne.s32.totalorder %s271, %s272
      %p284 = scmp.eq.s32.totalorder %s35, 1
      %p285 = por %p283, %p284
      %p287 = scmp.ne.s32.totalorder %s272, %s286
      %p288 = scmp.eq.s32.totalorder %s35, 0
      %p289 = por %p287, %p288
      %s291 = sadd.s32 %s290, 1
      %p294 = scmp.eq.s32.totalorder %s29, 1
      %p295 = scmp.ne.s32.totalorder %s290, %s292
      %p296 = scmp.eq.s32.totalorder %s29, 0
      %p297 = por %p295, %p296
      %p298 = scmp.ne.s32.totalorder %s290, %s292
      %p299 = scmp.eq.s32.totalorder %s34, 1
      %p300 = por %p298, %p299
      %p301 = scmp.ne.s32.totalorder %s292, %s293
      %p302 = scmp.eq.s32.totalorder %s34, 0
      %p303 = por %p301, %p302
      %p304 = scmp.ne.s32.totalorder %s292, %s293
      %p305 = scmp.eq.s32.totalorder %s35, 1
      %p306 = por %p304, %p305
      %p308 = scmp.ne.s32.totalorder %s293, %s307
      %p309 = scmp.eq.s32.totalorder %s35, 0
      %p310 = por %p308, %p309
      %s312 = sadd.s32 %s311, 1
      %p315 = scmp.eq.s32.totalorder %s29, 1
      %p316 = scmp.ne.s32.totalorder %s311, %s313
      %p317 = scmp.eq.s32.totalorder %s29, 0
      %p318 = por %p316, %p317
      %p319 = scmp.ne.s32.totalorder %s311, %s313
      %p320 = scmp.eq.s32.totalorder %s34, 1
      %p321 = por %p319, %p320
      %p322 = scmp.ne.s32.totalorder %s313, %s314
      %p323 = scmp.eq.s32.totalorder %s34, 0
      %p324 = por %p322, %p323
      %p325 = scmp.ne.s32.totalorder %s313, %s314
      %p326 = scmp.eq.s32.totalorder %s35, 1
      %p327 = por %p325, %p326
      %p329 = scmp.ne.s32.totalorder %s314, %s328
      %p330 = scmp.eq.s32.totalorder %s35, 0
      %p331 = por %p329, %p330
      %s333 = sadd.s32 %s332, 1
      %p336 = scmp.eq.s32.totalorder %s29, 1
      %p337 = scmp.ne.s32.totalorder %s332, %s334
      %p338 = scmp.eq.s32.totalorder %s29, 0
      %p339 = por %p337, %p338
      %p340 = scmp.ne.s32.totalorder %s332, %s334
      %p341 = scmp.eq.s32.totalorder %s34, 1
      %p342 = por %p340, %p341
      %p343 = scmp.ne.s32.totalorder %s334, %s335
      %p344 = scmp.eq.s32.totalorder %s34, 0
      %p345 = por %p343, %p344
      %p346 = scmp.ne.s32.totalorder %s334, %s335
      %p347 = scmp.eq.s32.totalorder %s35, 1
      %p348 = por %p346, %p347
      %p350 = scmp.ne.s32.totalorder %s335, %s349
      %p351 = scmp.eq.s32.totalorder %s35, 0
      %p352 = por %p350, %p351
      %s354 = sadd.s32 %s353, 1
      %p357 = scmp.eq.s32.totalorder %s29, 1
      %p358 = scmp.ne.s32.totalorder %s353, %s355
      %p359 = scmp.eq.s32.totalorder %s29, 0
      %p360 = por %p358, %p359
      %p361 = scmp.ne.s32.totalorder %s353, %s355
      %p362 = scmp.eq.s32.totalorder %s34, 1
      %p363 = por %p361, %p362
      %p364 = scmp.ne.s32.totalorder %s355, %s356
      %p365 = scmp.eq.s32.totalorder %s34, 0
      %p366 = por %p364, %p365
      %p367 = scmp.ne.s32.totalorder %s355, %s356
      %p368 = scmp.eq.s32.totalorder %s35, 1
      %p369 = por %p367, %p368
      %p371 = scmp.ne.s32.totalorder %s356, %s370
      %p372 = scmp.eq.s32.totalorder %s35, 0
      %p373 = por %p371, %p372
      %s375 = sadd.s32 %s374, 1
      %p378 = scmp.eq.s32.totalorder %s29, 1
      %p379 = scmp.ne.s32.totalorder %s374, %s376
      %p380 = scmp.eq.s32.totalorder %s29, 0
      %p381 = por %p379, %p380
      %p382 = scmp.ne.s32.totalorder %s374, %s376
      %p383 = scmp.eq.s32.totalorder %s34, 1
      %p384 = por %p382, %p383
      %p385 = scmp.ne.s32.totalorder %s376, %s377
      %p386 = scmp.eq.s32.totalorder %s34, 0
      %p387 = por %p385, %p386
      %p388 = scmp.ne.s32.totalorder %s376, %s377
      %p389 = scmp.eq.s32.totalorder %s35, 1
      %p390 = por %p388, %p389
      %p392 = scmp.ne.s32.totalorder %s377, %s391
      %p393 = scmp.eq.s32.totalorder %s35, 0
      %p394 = por %p392, %p393
      %s395 = ssub.s32 %s36, %s48
      %s396 = ssub.s32 %s37, %s44
      %s397 = sor.u32 %s395, %s396
      %p398 = scmp.eq.s32.totalorder %s397, 0
      %s400 = sadd.s32 %s399, 1
      %s401 = scalar_select %p398, %s399, %s400
      %p404 = pneg %p398
      %p405 = scmp.eq.s32.totalorder %s29, 1
      %p406 = por %p404, %p405
      %p407 = scmp.ne.s32.totalorder %s399, %s402
      %p408 = scmp.eq.s32.totalorder %s29, 0
      %p409 = por %p407, %p408
      %p410 = scmp.ne.s32.totalorder %s399, %s402
      %p411 = scmp.eq.s32.totalorder %s34, 1
      %p412 = por %p410, %p411
      %p413 = scmp.ne.s32.totalorder %s402, %s403
      %p414 = scmp.eq.s32.totalorder %s34, 0
      %p415 = por %p413, %p414
      %p416 = scmp.ne.s32.totalorder %s402, %s403
      %p417 = scmp.eq.s32.totalorder %s35, 1
      %p418 = por %p416, %p417
      %p420 = scmp.ne.s32.totalorder %s403, %s419
      %p421 = scmp.eq.s32.totalorder %s35, 0
      %p422 = por %p420, %p421
      %p423 = scmp.le.s32.totalorder 1, %s29
      %p424 = scmp.lt.s32.totalorder %s29, 3
      %p425 = pnand %p423, %p424
      %p426 = pneg %p425
      // Predicated region
      $region9: #{tpu_custom_call.1} parent=5 // pred_check
        _
      $region10: #{tpu_custom_call.1} parent=5 // pred_check_branch
        %428 = sbr.rel (%p425) target = $region12
      $region11: #{tpu_custom_call.1} parent=5 // pred_region
        %s429 = ssub.s32 %s29, 1
        // Predicated region
        $region13: #{tpu_custom_call.1} parent=11 // pred_check
          %p430 = pneg %p114
        $region14: #{tpu_custom_call.1} parent=11 // pred_check_branch
          %432 = sbr.rel (%p430) target = $region16
        $region15: #{tpu_custom_call.1} parent=11 // pred_region
          %s434 = ssub.s32 16, 16
          %435 = vsyncadd [#allocation7], %s434
          %s437 = sshll.u32 [#allocation6], 4
          %s438 = int_to_ptr.vmem [resolvable:$true] %s437
          %440 = dma.hbm_to_vmem [thread:$0]  %s2, 16, %s438, [#allocation7]
        $region16: #{tpu_custom_call.1} parent=11 // pred_fallthru
          _
        // Predicated region
        $region17: #{tpu_custom_call.1} parent=11 // pred_check
          %p441 = pneg %p135
        $region18: #{tpu_custom_call.1} parent=11 // pred_check_branch
          %443 = sbr.rel (%p441) target = $region20
        $region19: #{tpu_custom_call.1} parent=11 // pred_region
          %s445 = ssub.s32 16, 16
          %446 = vsyncadd [#allocation10], %s445
          %s448 = sshll.u32 [#allocation9], 4
          %s449 = int_to_ptr.vmem [resolvable:$true] %s448
          %451 = dma.hbm_to_vmem [thread:$0]  %s3, 16, %s449, [#allocation10]
        $region20: #{tpu_custom_call.1} parent=11 // pred_fallthru
          _
        // Predicated region
        $region21: #{tpu_custom_call.1} parent=11 // pred_check
          %p452 = pneg %p156
        $region22: #{tpu_custom_call.1} parent=11 // pred_check_branch
          %454 = sbr.rel (%p452) target = $region24
        $region23: #{tpu_custom_call.1} parent=11 // pred_region
          _
        $region24: #{tpu_custom_call.1} parent=11 // pred_fallthru
          _
        // Predicated region
        $region25: #{tpu_custom_call.1} parent=11 // pred_check
          %p455 = pneg %p177
        $region26: #{tpu_custom_call.1} parent=11 // pred_check_branch
          %457 = sbr.rel (%p455) target = $region28
        $region27: #{tpu_custom_call.1} parent=11 // pred_region
          %s459 = ssub.s32 16, 16
          %460 = vsyncadd [#allocation10], %s459
          %s462 = sshll.u32 [#allocation11], 4
          %s463 = int_to_ptr.vmem [resolvable:$true] %s462
          %465 = dma.hbm_to_vmem [thread:$0]  %s5, 16, %s463, [#allocation10]
        $region28: #{tpu_custom_call.1} parent=11 // pred_fallthru
          _
        // Predicated region
        $region29: #{tpu_custom_call.1} parent=11 // pred_check
          %p466 = pneg %p198
        $region30: #{tpu_custom_call.1} parent=11 // pred_check_branch
          %468 = sbr.rel (%p466) target = $region32
        $region31: #{tpu_custom_call.1} parent=11 // pred_region
          _
        $region32: #{tpu_custom_call.1} parent=11 // pred_fallthru
          _
        // Predicated region
        $region33: #{tpu_custom_call.1} parent=11 // pred_check
          %p469 = pneg %p219
        $region34: #{tpu_custom_call.1} parent=11 // pred_check_branch
          %471 = sbr.rel (%p469) target = $region36
        $region35: #{tpu_custom_call.1} parent=11 // pred_region
          %s473 = ssub.s32 16, 16
          %474 = vsyncadd [#allocation13], %s473
          %s476 = sshll.u32 [#allocation12], 4
          %s477 = int_to_ptr.vmem [resolvable:$true] %s476
          %479 = dma.hbm_to_vmem [thread:$0]  %s7, 16, %s477, [#allocation13]
        $region36: #{tpu_custom_call.1} parent=11 // pred_fallthru
          _
        // Predicated region
        $region37: #{tpu_custom_call.1} parent=11 // pred_check
          %p480 = pneg %p240
        $region38: #{tpu_custom_call.1} parent=11 // pred_check_branch
          %482 = sbr.rel (%p480) target = $region40
        $region39: #{tpu_custom_call.1} parent=11 // pred_region
          %s484 = ssub.s32 256, 256
          %485 = vsyncadd [#allocation13], %s484
          %s486 = sshll.u32 [#allocation14], 4
          %s487 = int_to_ptr.vmem [resolvable:$true] %s486
          %492 = dma.hbm_to_vmem [thread:$0]  %s8, 256, %s487, [#allocation13], 64, 64, 4
        $region40: #{tpu_custom_call.1} parent=11 // pred_fallthru
          _
        // Predicated region
        $region41: #{tpu_custom_call.1} parent=11 // pred_check
          %p493 = pneg %p261
        $region42: #{tpu_custom_call.1} parent=11 // pred_check_branch
          %495 = sbr.rel (%p493) target = $region44
        $region43: #{tpu_custom_call.1} parent=11 // pred_region
          %s497 = ssub.s32 16, 16
          %498 = vsyncadd [#allocation16], %s497
          %s500 = sshll.u32 [#allocation15], 4
          %s501 = int_to_ptr.vmem [resolvable:$true] %s500
          %503 = dma.hbm_to_vmem [thread:$0]  %s9, 16, %s501, [#allocation16]
        $region44: #{tpu_custom_call.1} parent=11 // pred_fallthru
          _
        // Predicated region
        $region45: #{tpu_custom_call.1} parent=11 // pred_check
          %p504 = pneg %p282
        $region46: #{tpu_custom_call.1} parent=11 // pred_check_branch
          %506 = sbr.rel (%p504) target = $region48
        $region47: #{tpu_custom_call.1} parent=11 // pred_region
          _
        $region48: #{tpu_custom_call.1} parent=11 // pred_fallthru
          _
        // Predicated region
        $region49: #{tpu_custom_call.1} parent=11 // pred_check
          %p507 = pneg %p303
        $region50: #{tpu_custom_call.1} parent=11 // pred_check_branch
          %509 = sbr.rel (%p507) target = $region52
        $region51: #{tpu_custom_call.1} parent=11 // pred_region
          _
        $region52: #{tpu_custom_call.1} parent=11 // pred_fallthru
          _
        // Predicated region
        $region53: #{tpu_custom_call.1} parent=11 // pred_check
          %p510 = pneg %p324
        $region54: #{tpu_custom_call.1} parent=11 // pred_check_branch
          %512 = sbr.rel (%p510) target = $region56
        $region55: #{tpu_custom_call.1} parent=11 // pred_region
          _
        $region56: #{tpu_custom_call.1} parent=11 // pred_fallthru
          _
        // Predicated region
        $region57: #{tpu_custom_call.1} parent=11 // pred_check
          %p513 = pneg %p345
        $region58: #{tpu_custom_call.1} parent=11 // pred_check_branch
          %515 = sbr.rel (%p513) target = $region60
        $region59: #{tpu_custom_call.1} parent=11 // pred_region
          _
        $region60: #{tpu_custom_call.1} parent=11 // pred_fallthru
          _
        // Predicated region
        $region61: #{tpu_custom_call.1} parent=11 // pred_check
          %p516 = pneg %p366
        $region62: #{tpu_custom_call.1} parent=11 // pred_check_branch
          %518 = sbr.rel (%p516) target = $region64
        $region63: #{tpu_custom_call.1} parent=11 // pred_region
          _
        $region64: #{tpu_custom_call.1} parent=11 // pred_fallthru
          _
        // Predicated region
        $region65: #{tpu_custom_call.1} parent=11 // pred_check
          %p519 = pneg %p387
        $region66: #{tpu_custom_call.1} parent=11 // pred_check_branch
          %521 = sbr.rel (%p519) target = $region68
        $region67: #{tpu_custom_call.1} parent=11 // pred_region
          _
        $region68: #{tpu_custom_call.1} parent=11 // pred_fallthru
          _
      $region12: #{tpu_custom_call.1} parent=5 // pred_fallthru
        _
      %p522 = scmp.lt.s32.totalorder %s29, 2
      // Predicated region
      $region69: #{tpu_custom_call.1} parent=5 // pred_check
        %p523 = pneg %p522
      $region70: #{tpu_custom_call.1} parent=5 // pred_check_branch
        %525 = sbr.rel (%p523) target = $region72
      $region71: #{tpu_custom_call.1} parent=5 // pred_region
        // Predicated region
        $region73: #{tpu_custom_call.1} parent=71 // pred_check
          %p526 = pneg %p61
        $region74: #{tpu_custom_call.1} parent=71 // pred_check_branch
          %528 = sbr.rel (%p526) target = $region76
        $region75: #{tpu_custom_call.1} parent=71 // pred_region
          %p529 = scmp.lt.s32.totalorder %s36, 1
          %s530 = scalar_select %p529, %s36, 1
          %s531 = smul.addr %s530, 8
          %s532 = scalar_lea.vmem %s0, %s531
        $region76: #{tpu_custom_call.1} parent=71 // pred_fallthru
          _
        // Predicated region
        $region77: #{tpu_custom_call.1} parent=71 // pred_check
          %p533 = pneg %p87
        $region78: #{tpu_custom_call.1} parent=71 // pred_check_branch
          %535 = sbr.rel (%p533) target = $region80
        $region79: #{tpu_custom_call.1} parent=71 // pred_region
          %p536 = scmp.lt.s32.totalorder %s36, 1
          %s537 = scalar_select %p536, %s36, 1
          %s538 = scalar_lea.vmem %s1, %s537
        $region80: #{tpu_custom_call.1} parent=71 // pred_fallthru
          _
      $region72: #{tpu_custom_call.1} parent=5 // pred_fallthru
        _
      %p539 = scmp.le.s32.totalorder 1, %s29
      %p540 = scmp.lt.s32.totalorder %s29, 3
      %p541 = pnand %p539, %p540
      %p542 = pneg %p541
      // Predicated region
      $region81: #{tpu_custom_call.1} parent=5 // pred_check
        _
      $region82: #{tpu_custom_call.1} parent=5 // pred_check_branch
        %544 = sbr.rel (%p541) target = $region84
      $region83: #{tpu_custom_call.1} parent=5 // pred_region
        %s545 = ssub.s32 %s29, 1
        // Predicated region
        $region85: #{tpu_custom_call.1} parent=83 // pred_check
          %p546 = pneg %p114
        $region86: #{tpu_custom_call.1} parent=83 // pred_check_branch
          %548 = sbr.rel (%p546) target = $region88
        $region87: #{tpu_custom_call.1} parent=83 // pred_region
          %549 = dma.done [#allocation7], 16
        $region88: #{tpu_custom_call.1} parent=83 // pred_fallthru
          _
        // Predicated region
        $region89: #{tpu_custom_call.1} parent=83 // pred_check
          %p550 = pneg %p135
        $region90: #{tpu_custom_call.1} parent=83 // pred_check_branch
          %552 = sbr.rel (%p550) target = $region92
        $region91: #{tpu_custom_call.1} parent=83 // pred_region
          %553 = dma.done [#allocation10], 16
        $region92: #{tpu_custom_call.1} parent=83 // pred_fallthru
          _
        // Predicated region
        $region93: #{tpu_custom_call.1} parent=83 // pred_check
          %p554 = pneg %p177
        $region94: #{tpu_custom_call.1} parent=83 // pred_check_branch
          %556 = sbr.rel (%p554) target = $region96
        $region95: #{tpu_custom_call.1} parent=83 // pred_region
          %557 = dma.done [#allocation10], 16
        $region96: #{tpu_custom_call.1} parent=83 // pred_fallthru
          _
        // Predicated region
        $region97: #{tpu_custom_call.1} parent=83 // pred_check
          %p558 = pneg %p219
        $region98: #{tpu_custom_call.1} parent=83 // pred_check_branch
          %560 = sbr.rel (%p558) target = $region100
        $region99: #{tpu_custom_call.1} parent=83 // pred_region
          %561 = dma.done [#allocation13], 16
        $region100: #{tpu_custom_call.1} parent=83 // pred_fallthru
          _
        // Predicated region
        $region101: #{tpu_custom_call.1} parent=83 // pred_check
          %p562 = pneg %p240
        $region102: #{tpu_custom_call.1} parent=83 // pred_check_branch
          %564 = sbr.rel (%p562) target = $region104
        $region103: #{tpu_custom_call.1} parent=83 // pred_region
          %565 = dma.done [#allocation13], 256
        $region104: #{tpu_custom_call.1} parent=83 // pred_fallthru
          _
        // Predicated region
        $region105: #{tpu_custom_call.1} parent=83 // pred_check
          %p566 = pneg %p261
        $region106: #{tpu_custom_call.1} parent=83 // pred_check_branch
          %568 = sbr.rel (%p566) target = $region108
        $region107: #{tpu_custom_call.1} parent=83 // pred_region
          %569 = dma.done [#allocation16], 16
        $region108: #{tpu_custom_call.1} parent=83 // pred_fallthru
          _
        %p570 = scmp.lt.s32.totalorder %s38, 1
        %s571 = scalar_select %p570, %s38, 1
        %s572 = smul.addr %s571, 8
        %s573 = scalar_lea.vmem %s0, %s572
        %p574 = pneg %p67
        %p575 = pneg %p64
        %p576 = scmp.lt.s32.totalorder %s38, 1
        %s577 = scalar_select %p576, %s38, 1
        %s578 = scalar_lea.vmem %s1, %s577
        %p579 = pneg %p93
        %p580 = pneg %p90
        %p581 = pneg %p114
        %p582 = pneg %p111
        %p583 = pneg %p135
        %p584 = pneg %p132
        %p585 = pneg %p156
        %p586 = pneg %p153
        %p587 = pneg %p177
        %p588 = pneg %p174
        %p589 = pneg %p198
        %p590 = pneg %p195
        %p591 = pneg %p219
        %p592 = pneg %p216
        %p593 = pneg %p240
        %p594 = pneg %p237
        %p595 = pneg %p261
        %p596 = pneg %p258
        %p597 = pneg %p282
        %p598 = pneg %p279
        %p599 = pneg %p303
        %p600 = pneg %p300
        %p601 = pneg %p324
        %p602 = pneg %p321
        %p603 = pneg %p345
        %p604 = pneg %p342
        %p605 = pneg %p366
        %p606 = pneg %p363
        %p607 = pneg %p387
        %p608 = pneg %p384
        %p609 = pneg %p415
        %p610 = pneg %p412
        %s611 = sand.u32 %s402, 1
        %s612 = scalar_lea.sflag [#allocation8], %s611
        %s613 = sand.u32 %s402, 1
        %s614 = smul.addr %s613, 8
        %s615 = scalar_lea.vmem [#allocation17], %s614
        %p616 = scmp.lt.s32.totalorder %s38, 1
        %s617 = scalar_select %p616, %s38, 1
        %s618 = smul.addr %s617, 8
        %s619 = scalar_lea.vmem %s0, %s618
        %p620 = scmp.lt.s32.totalorder %s38, 1
        %s621 = scalar_select %p620, %s38, 1
        %s622 = scalar_lea.vmem %s1, %s621
        %p624 = scmp.eq.s32.totalorder %s39, 0
        // Predicated region
        $region109: #{tpu_custom_call.1} parent=83 // pred_check
          %p625 = pneg %p624
        $region110: #{tpu_custom_call.1} parent=83 // pred_check_branch
          %627 = sbr.rel (%p625) target = $region112
        $region111: #{tpu_custom_call.1} parent=83 // pred_region
          %v628 = vld [vmem:[%s619] sm:$0xff]
          %v629 = vld [vmem:[#allocation6] sm:$0x1]
          %v630 = vld [vmem:[#allocation9] sm:$0x1]
          %vm631 = vcmask 261120
          %v632 = vsel %vm631, %v628, 0.0
          %633 = vadd.xlane.f32.xlu0 %v632
          %v634 = vpop.xlane.xlu0 %633
          %v635 = vrcp.pop 32.0
          %v636 = vmul.f32 %v634, %v635
          %v637 = vsub.f32 %v628, %v636
          %v638 = vmul.f32 %v637, %v637
          %v639 = vsel %vm631, %v638, 0.0
          %640 = vadd.xlane.f32.xlu0 %v639
          %v641 = vpop.xlane.xlu0 %640
          %v642 = vmul.f32 %v641, 0.032258064
          %v643 = vrsqrt.pop %v642
          %v644 = vmul.f32 %v642, %v643
          %vm645 = vcmp.eq.f32.partialorder %v642, inf
          %v646 = vsel %vm645, %v642, %v644
          %vm647 = vcmp.eq.f32.partialorder %v642, 0.0
          %v648 = vand.u32 %v642, 2147483648
          %v649 = vsel %vm647, %v648, %v646
          %v650 = vadd.f32 %v649, 1e-06
          %v651 = vrcp.pop %v650
          %v653 = vlaneseq
          %v654 = vshrl.u32 %v653, 7
          %v655 = vsub.s32 0, %v654
          %v656 = vrot.slane %v629, %v655
          %v658 = vmul.f32 %v656, %v637
          %v659 = vmul.f32 %v658, %v651
          %v661 = vlaneseq
          %v662 = vshrl.u32 %v661, 7
          %v663 = vsub.s32 0, %v662
          %v664 = vrot.slane %v630, %v663
          %v666 = vadd.f32 %v659, %v664
          %v667 = vpack.c.bf16 %v666, %v666
          %vm668 = vcmask 257024
          %669 = vst.msk [vmem:[#allocation2] sm:$0xf] %vm668, %v667
          %v670 = vld [vmem:[%s6] sm:$0xf]
          %v671 = vld [vmem:[%s6 + $0x4] sm:$0xf]
          %v672 = vld [vmem:[%s6 + $0x8] sm:$0xf]
          %v673 = vld [vmem:[%s6 + $0xc] sm:$0xf]
          %v674 = vld [vmem:[#allocation12] sm:$0x1]
          %v676 = vlaneseq
          %v677 = vshrl.u32 %v676, 7
          %v678 = vsub.s32 0, %v677
          %v679 = vrot.slane %v674, %v678
          %v685 = vunpack.c.l.b16 %v670
          %v686 = vunpack.c.l.b16 %v671
          %v687 = vunpack.c.l.b16 %v672
          %v688 = vunpack.c.l.b16 %v673
          %v689 = vpack.c.b16 %v686, %v685
          %v690 = vpack.c.b16 %v688, %v687
          %v694 = vsel %vm631, %v667, 0
          %696 = vmatprep.subr.bf16.mxu0 0
          %697 = vmatpush1.bf16.msra.mxu0 %v689
          %698 = vmatprep.subr.bf16.mxu0 0
          %699 = vmatpush1.bf16.msra.mxu0 %v690
          %700 = vmatprep.subr.bf16.mxu0 0
          %701 = vmatpush1.bf16.msra.mxu0 0
          %702 = vmatprep.subr.bf16.mxu0 0
          %703 = vmatpush1.bf16.msra.mxu0 0
          %704 = vmatprep.subr.bf16.mxu0 0
          %705 = vmatpush1.bf16.msra.mxu0 0
          %706 = vmatprep.subr.bf16.mxu0 0
          %707 = vmatpush1.bf16.msra.mxu0 0
          %708 = vmatprep.subr.bf16.mxu0 0
          %709 = vmatpush1.bf16.msra.mxu0 0
          %710 = vmatprep.subr.bf16.mxu0 0
          %711 = vmatpush1.bf16.msra.mxu0 0
          %712 = vmatprep.subr.bf16.mxu0 0
          %713 = vmatpush1.bf16.msra.mxu0 0
          %714 = vmatprep.subr.bf16.mxu0 0
          %715 = vmatpush1.bf16.msra.mxu0 0
          %716 = vmatprep.subr.bf16.mxu0 0
          %717 = vmatpush1.bf16.msra.mxu0 0
          %718 = vmatprep.subr.bf16.mxu0 0
          %719 = vmatpush1.bf16.msra.mxu0 0
          %720 = vmatprep.subr.bf16.mxu0 0
          %721 = vmatpush1.bf16.msra.mxu0 0
          %722 = vmatprep.subr.bf16.mxu0 0
          %723 = vmatpush1.bf16.msra.mxu0 0
          %724 = vmatprep.subr.bf16.mxu0 0
          %725 = vmatpush1.bf16.msra.mxu0 0
          %726 = vmatprep.subr.bf16.mxu0 0
          %727 = vmatpush1.bf16.msra.mxu0 0
          %728 = vmatprep.mubr.bf16.mxu0 0
          %729 = vmatmul.mubr.bf16.gmra.mrb[0].mxu0 %v694
          %v730 = vpop.f32.mrb[0].mxu0
          %v731 = vadd.f32 %v679, %v730
          %v732 = vpop.f32.mrb[0].mxu0
          %v733 = vpop.f32.mrb[0].mxu0
          %v734 = vpop.f32.mrb[0].mxu0
          %735 = vdwg.mxu0
          %v736 = vpack.c.bf16 %v731, %v731
          %737 = vst.msk [vmem:[#allocation3] sm:$0xf] %vm668, %v736
          %v739 = vunpack.c.l.b16 %v736
          %v740 = vpack.c.b16 %v739, %v739
          %741 = vrot.lane.b32.xlu0 %v740, 96
          %v742 = vpop.permute.xlu0 %741
          %744 = vst.msk [vmem:[#allocation4] sm:$0xf] %vm668, %v742
        $region112: #{tpu_custom_call.1} parent=83 // pred_fallthru
          _
        %s745 = smul.u32 %s39, 8
        %s746 = scalar_lea.vmem %s619, %s745
        %v747 = vld [vmem:[%s746] sm:$0xff]
        %s748 = sshra.s32 %s745, 3
        %s749 = sand.u32 %s745, 7
        %s750 = smul.addr %s748, 4
        %s751 = scalar_lea.vmem [#allocation2], %s750
        %v752 = vld [vmem:[%s751] sm:$0xf]
        %v753 = vld [vmem:[%s4] sm:$0xf]
        %v754 = vld [vmem:[%s4 + $0x4] sm:$0xf]
        %v755 = vld [vmem:[%s4 + $0x8] sm:$0xf]
        %v756 = vld [vmem:[%s4 + $0xc] sm:$0xf]
        %v757 = vld [vmem:[#allocation11] sm:$0x1]
        %v759 = vlaneseq
        %v760 = vshrl.u32 %v759, 7
        %v761 = vsub.s32 0, %v760
        %v762 = vrot.slane %v757, %v761
        %v768 = vunpack.c.l.b16 %v753
        %v769 = vunpack.c.l.b16 %v754
        %v770 = vunpack.c.l.b16 %v755
        %v771 = vunpack.c.l.b16 %v756
        %v772 = vpack.c.b16 %v769, %v768
        %v773 = vpack.c.b16 %v771, %v770
        %vm776 = vcmask 261120
        %v778 = vsel %vm776, %v752, 0
        %780 = vmatprep.subr.bf16.mxu0 0
        %781 = vmatpush1.bf16.msra.mxu0 %v772
        %782 = vmatprep.subr.bf16.mxu0 0
        %783 = vmatpush1.bf16.msra.mxu0 %v773
        %784 = vmatprep.subr.bf16.mxu0 0
        %785 = vmatpush1.bf16.msra.mxu0 0
        %786 = vmatprep.subr.bf16.mxu0 0
        %787 = vmatpush1.bf16.msra.mxu0 0
        %788 = vmatprep.subr.bf16.mxu0 0
        %789 = vmatpush1.bf16.msra.mxu0 0
        %790 = vmatprep.subr.bf16.mxu0 0
        %791 = vmatpush1.bf16.msra.mxu0 0
        %792 = vmatprep.subr.bf16.mxu0 0
        %793 = vmatpush1.bf16.msra.mxu0 0
        %794 = vmatprep.subr.bf16.mxu0 0
        %795 = vmatpush1.bf16.msra.mxu0 0
        %796 = vmatprep.subr.bf16.mxu0 0
        %797 = vmatpush1.bf16.msra.mxu0 0
        %798 = vmatprep.subr.bf16.mxu0 0
        %799 = vmatpush1.bf16.msra.mxu0 0
        %800 = vmatprep.subr.bf16.mxu0 0
        %801 = vmatpush1.bf16.msra.mxu0 0
        %802 = vmatprep.subr.bf16.mxu0 0
        %803 = vmatpush1.bf16.msra.mxu0 0
        %804 = vmatprep.subr.bf16.mxu0 0
        %805 = vmatpush1.bf16.msra.mxu0 0
        %806 = vmatprep.subr.bf16.mxu0 0
        %807 = vmatpush1.bf16.msra.mxu0 0
        %808 = vmatprep.subr.bf16.mxu0 0
        %809 = vmatpush1.bf16.msra.mxu0 0
        %810 = vmatprep.subr.bf16.mxu0 0
        %811 = vmatpush1.bf16.msra.mxu0 0
        %812 = vmatprep.mubr.bf16.mxu0 0
        %813 = vmatmul.mubr.bf16.gmra.mrb[0].mxu0 %v778
        %v814 = vpop.f32.mrb[0].mxu0
        %v815 = vadd.f32 %v762, %v814
        %v816 = vpop.f32.mrb[0].mxu0
        %v817 = vpop.f32.mrb[0].mxu0
        %v818 = vpop.f32.mrb[0].mxu0
        %819 = vdwg.mxu0
        %v820 = vpack.c.bf16 %v815, %v815
        %v821 = vld [vmem:[#allocation3] sm:$0xf]
        %v822 = vld [vmem:[#allocation4] sm:$0xf]
        %v823 = vld [vmem:[%s622] sm:$0x1]
        %v824 = vsub.f32 %v823, 1.0
        %v825 = vmul.f32 %v824, 1e+09
        %v827 = vlaneseq
        %v828 = vshrl.u32 %v827, 7
        %v829 = vsub.s32 0, %v828
        %v830 = vrot.slane %v825, %v829
        %vm832 = vcmask 64512
        %v834 = vsel %vm832, %v820, 0
        %v837 = vsel %vm832, %v821, 0
        %839 = vmatprep.subr.bf16.mxu0 0
        %840 = vmatpush1.bf16.xpose.msra.mxu0 %v837
        %841 = vmatprep.subr.bf16.mxu0 0
        %842 = vmatpush1.bf16.xpose.msra.mxu0 0
        %843 = vmatprep.subr.bf16.mxu0 0
        %844 = vmatpush1.bf16.xpose.msra.mxu0 0
        %845 = vmatprep.subr.bf16.mxu0 0
        %846 = vmatpush1.bf16.xpose.msra.mxu0 0
        %847 = vmatprep.subr.bf16.mxu0 0
        %848 = vmatpush1.bf16.xpose.msra.mxu0 0
        %849 = vmatprep.subr.bf16.mxu0 0
        %850 = vmatpush1.bf16.xpose.msra.mxu0 0
        %851 = vmatprep.subr.bf16.mxu0 0
        %852 = vmatpush1.bf16.xpose.msra.mxu0 0
        %853 = vmatprep.subr.bf16.mxu0 0
        %854 = vmatpush1.bf16.xpose.msra.mxu0 0
        %855 = vmatprep.subr.bf16.mxu0 0
        %856 = vmatpush1.bf16.xpose.msra.mxu0 0
        %857 = vmatprep.subr.bf16.mxu0 0
        %858 = vmatpush1.bf16.xpose.msra.mxu0 0
        %859 = vmatprep.subr.bf16.mxu0 0
        %860 = vmatpush1.bf16.xpose.msra.mxu0 0
        %861 = vmatprep.subr.bf16.mxu0 0
        %862 = vmatpush1.bf16.xpose.msra.mxu0 0
        %863 = vmatprep.subr.bf16.mxu0 0
        %864 = vmatpush1.bf16.xpose.msra.mxu0 0
        %865 = vmatprep.subr.bf16.mxu0 0
        %866 = vmatpush1.bf16.xpose.msra.mxu0 0
        %867 = vmatprep.subr.bf16.mxu0 0
        %868 = vmatpush1.bf16.xpose.msra.mxu0 0
        %869 = vmatprep.subr.bf16.mxu0 0
        %870 = vmatpush1.bf16.xpose.msra.mxu0 0
        %871 = vmatprep.mubr.bf16.mxu0 0
        %872 = vmatmul.mubr.bf16.gmra.mrb[0].mxu0 %v834
        %v873 = vpop.f32.mrb[0].mxu0
        %v874 = vadd.f32 %v830, %v873
        %v875 = vpop.f32.mrb[0].mxu0
        %v876 = vpop.f32.mrb[0].mxu0
        %v877 = vpop.f32.mrb[0].mxu0
        %878 = vdwg.mxu0
        %v879 = vsel %vm832, %v874, -inf
        %880 = vmax.xlane.f32.xlu0 %v879
        %v881 = vpop.xlane.xlu0 %880
        %v882 = vsub.f32 %v874, %v881
        %v883 = vmul.f32 %v882, 1.442695
        %v884 = vpow.pop %v883
        %v885 = vsel %vm832, %v884, 0.0
        %886 = vadd.xlane.f32.xlu0 %v885
        %v887 = vpop.xlane.xlu0 %886
        %v888 = vrcp.pop %v887
        %v889 = vmul.f32 %v884, %v888
        %v890 = vpack.c.bf16 %v889, %v889
        %v892 = vsel %vm832, %v890, 0
        %vm894 = vcmask 1043456
        %v896 = vsel %vm894, %v822, 0
        %898 = vmatprep.subr.bf16.mxu0 0
        %899 = vmatpush1.bf16.msra.mxu0 %v896
        %900 = vmatprep.subr.bf16.mxu0 0
        %901 = vmatpush1.bf16.msra.mxu0 0
        %902 = vmatprep.subr.bf16.mxu0 0
        %903 = vmatpush1.bf16.msra.mxu0 0
        %904 = vmatprep.subr.bf16.mxu0 0
        %905 = vmatpush1.bf16.msra.mxu0 0
        %906 = vmatprep.subr.bf16.mxu0 0
        %907 = vmatpush1.bf16.msra.mxu0 0
        %908 = vmatprep.subr.bf16.mxu0 0
        %909 = vmatpush1.bf16.msra.mxu0 0
        %910 = vmatprep.subr.bf16.mxu0 0
        %911 = vmatpush1.bf16.msra.mxu0 0
        %912 = vmatprep.subr.bf16.mxu0 0
        %913 = vmatpush1.bf16.msra.mxu0 0
        %914 = vmatprep.subr.bf16.mxu0 0
        %915 = vmatpush1.bf16.msra.mxu0 0
        %916 = vmatprep.subr.bf16.mxu0 0
        %917 = vmatpush1.bf16.msra.mxu0 0
        %918 = vmatprep.subr.bf16.mxu0 0
        %919 = vmatpush1.bf16.msra.mxu0 0
        %920 = vmatprep.subr.bf16.mxu0 0
        %921 = vmatpush1.bf16.msra.mxu0 0
        %922 = vmatprep.subr.bf16.mxu0 0
        %923 = vmatpush1.bf16.msra.mxu0 0
        %924 = vmatprep.subr.bf16.mxu0 0
        %925 = vmatpush1.bf16.msra.mxu0 0
        %926 = vmatprep.subr.bf16.mxu0 0
        %927 = vmatpush1.bf16.msra.mxu0 0
        %928 = vmatprep.subr.bf16.mxu0 0
        %929 = vmatpush1.bf16.msra.mxu0 0
        %930 = vmatprep.mubr.bf16.mxu0 0
        %931 = vmatmul.mubr.bf16.gmra.mrb[0].mxu0 %v892
        %v932 = vpop.f32.mrb[0].mxu0
        %v933 = vadd.f32 0.0, %v932
        %v934 = vpop.f32.mrb[0].mxu0
        %v935 = vpop.f32.mrb[0].mxu0
        %v936 = vpop.f32.mrb[0].mxu0
        %937 = vdwg.mxu0
        %v938 = vpack.c.bf16 %v933, %v933
        %vm939 = vcmask 60416
        %940 = vst.msk [vmem:[#allocation5] sm:$0xf] %vm939, %v938
        %942 = vrot.lane.b32.xlu0 %v820, 120
        %v943 = vpop.permute.xlu0 %942
        %v945 = vunpack.c.l.b16 %v821
        %v946 = vpack.c.b16 %v945, %v945
        %947 = vrot.lane.b32.xlu0 %v946, 120
        %v948 = vpop.permute.xlu0 %947
        %v950 = vsel %vm832, %v943, 0
        %v953 = vsel %vm832, %v948, 0
        %955 = vmatprep.subr.bf16.mxu0 0
        %956 = vmatpush1.bf16.xpose.msra.mxu0 %v953
        %957 = vmatprep.subr.bf16.mxu0 0
        %958 = vmatpush1.bf16.xpose.msra.mxu0 0
        %959 = vmatprep.subr.bf16.mxu0 0
        %960 = vmatpush1.bf16.xpose.msra.mxu0 0
        %961 = vmatprep.subr.bf16.mxu0 0
        %962 = vmatpush1.bf16.xpose.msra.mxu0 0
        %963 = vmatprep.subr.bf16.mxu0 0
        %964 = vmatpush1.bf16.xpose.msra.mxu0 0
        %965 = vmatprep.subr.bf16.mxu0 0
        %966 = vmatpush1.bf16.xpose.msra.mxu0 0
        %967 = vmatprep.subr.bf16.mxu0 0
        %968 = vmatpush1.bf16.xpose.msra.mxu0 0
        %969 = vmatprep.subr.bf16.mxu0 0
        %970 = vmatpush1.bf16.xpose.msra.mxu0 0
        %971 = vmatprep.subr.bf16.mxu0 0
        %972 = vmatpush1.bf16.xpose.msra.mxu0 0
        %973 = vmatprep.subr.bf16.mxu0 0
        %974 = vmatpush1.bf16.xpose.msra.mxu0 0
        %975 = vmatprep.subr.bf16.mxu0 0
        %976 = vmatpush1.bf16.xpose.msra.mxu0 0
        %977 = vmatprep.subr.bf16.mxu0 0
        %978 = vmatpush1.bf16.xpose.msra.mxu0 0
        %979 = vmatprep.subr.bf16.mxu0 0
        %980 = vmatpush1.bf16.xpose.msra.mxu0 0
        %981 = vmatprep.subr.bf16.mxu0 0
        %982 = vmatpush1.bf16.xpose.msra.mxu0 0
        %983 = vmatprep.subr.bf16.mxu0 0
        %984 = vmatpush1.bf16.xpose.msra.mxu0 0
        %985 = vmatprep.subr.bf16.mxu0 0
        %986 = vmatpush1.bf16.xpose.msra.mxu0 0
        %987 = vmatprep.mubr.bf16.mxu0 0
        %988 = vmatmul.mubr.bf16.gmra.mrb[0].mxu0 %v950
        %v989 = vpop.f32.mrb[0].mxu0
        %v990 = vadd.f32 %v830, %v989
        %v991 = vpop.f32.mrb[0].mxu0
        %v992 = vpop.f32.mrb[0].mxu0
        %v993 = vpop.f32.mrb[0].mxu0
        %994 = vdwg.mxu0
        %v995 = vsel %vm832, %v990, -inf
        %996 = vmax.xlane.f32.xlu0 %v995
        %v997 = vpop.xlane.xlu0 %996
        %v998 = vsub.f32 %v990, %v997
        %v999 = vmul.f32 %v998, 1.442695
        %v1000 = vpow.pop %v999
        %v1001 = vsel %vm832, %v1000, 0.0
        %1002 = vadd.xlane.f32.xlu0 %v1001
        %v1003 = vpop.xlane.xlu0 %1002
        %v1004 = vrcp.pop %v1003
        %v1005 = vmul.f32 %v1000, %v1004
        %v1006 = vpack.c.bf16 %v1005, %v1005
        %v1008 = vunpack.c.l.b16 %v822
        %v1009 = vpack.c.b16 %v1008, %v1008
        %1010 = vrot.lane.b32.xlu0 %v1009, 120
        %v1011 = vpop.permute.xlu0 %1010
        %v1013 = vsel %vm832, %v1006, 0
        %v1016 = vsel %vm894, %v1011, 0
        %1018 = vmatprep.subr.bf16.mxu0 0
        %1019 = vmatpush1.bf16.msra.mxu0 %v1016
        %1020 = vmatprep.subr.bf16.mxu0 0
        %1021 = vmatpush1.bf16.msra.mxu0 0
        %1022 = vmatprep.subr.bf16.mxu0 0
        %1023 = vmatpush1.bf16.msra.mxu0 0
        %1024 = vmatprep.subr.bf16.mxu0 0
        %1025 = vmatpush1.bf16.msra.mxu0 0
        %1026 = vmatprep.subr.bf16.mxu0 0
        %1027 = vmatpush1.bf16.msra.mxu0 0
        %1028 = vmatprep.subr.bf16.mxu0 0
        %1029 = vmatpush1.bf16.msra.mxu0 0
        %1030 = vmatprep.subr.bf16.mxu0 0
        %1031 = vmatpush1.bf16.msra.mxu0 0
        %1032 = vmatprep.subr.bf16.mxu0 0
        %1033 = vmatpush1.bf16.msra.mxu0 0
        %1034 = vmatprep.subr.bf16.mxu0 0
        %1035 = vmatpush1.bf16.msra.mxu0 0
        %1036 = vmatprep.subr.bf16.mxu0 0
        %1037 = vmatpush1.bf16.msra.mxu0 0
        %1038 = vmatprep.subr.bf16.mxu0 0
        %1039 = vmatpush1.bf16.msra.mxu0 0
        %1040 = vmatprep.subr.bf16.mxu0 0
        %1041 = vmatpush1.bf16.msra.mxu0 0
        %1042 = vmatprep.subr.bf16.mxu0 0
        %1043 = vmatpush1.bf16.msra.mxu0 0
        %1044 = vmatprep.subr.bf16.mxu0 0
        %1045 = vmatpush1.bf16.msra.mxu0 0
        %1046 = vmatprep.subr.bf16.mxu0 0
        %1047 = vmatpush1.bf16.msra.mxu0 0
        %1048 = vmatprep.subr.bf16.mxu0 0
        %1049 = vmatpush1.bf16.msra.mxu0 0
        %1050 = vmatprep.mubr.bf16.mxu0 0
        %1051 = vmatmul.mubr.bf16.gmra.mrb[0].mxu0 %v1013
        %v1052 = vpop.f32.mrb[0].mxu0
        %v1053 = vadd.f32 0.0, %v1052
        %v1054 = vpop.f32.mrb[0].mxu0
        %v1055 = vpop.f32.mrb[0].mxu0
        %v1056 = vpop.f32.mrb[0].mxu0
        %1057 = vdwg.mxu0
        %v1058 = vpack.c.bf16 %v1053, %v1053
        %v1060 = vunpack.c.l.b16 %v1058
        %v1061 = vpack.c.b16 %v1060, %v1060
        %1062 = vrot.lane.b32.xlu0 %v1061, 8
        %v1063 = vpop.permute.xlu0 %1062
        %vm1065 = vcmask 126016
        %1066 = vst.msk [vmem:[#allocation5] sm:$0xf] %vm1065, %v1063
        %1067 = vrot.lane.b32.xlu0 %v820, 112
        %v1068 = vpop.permute.xlu0 %1067
        %1069 = vrot.lane.b32.xlu0 %v946, 112
        %v1070 = vpop.permute.xlu0 %1069
        %v1072 = vsel %vm832, %v1068, 0
        %v1075 = vsel %vm832, %v1070, 0
        %1077 = vmatprep.subr.bf16.mxu0 0
        %1078 = vmatpush1.bf16.xpose.msra.mxu0 %v1075
        %1079 = vmatprep.subr.bf16.mxu0 0
        %1080 = vmatpush1.bf16.xpose.msra.mxu0 0
        %1081 = vmatprep.subr.bf16.mxu0 0
        %1082 = vmatpush1.bf16.xpose.msra.mxu0 0
        %1083 = vmatprep.subr.bf16.mxu0 0
        %1084 = vmatpush1.bf16.xpose.msra.mxu0 0
        %1085 = vmatprep.subr.bf16.mxu0 0
        %1086 = vmatpush1.bf16.xpose.msra.mxu0 0
        %1087 = vmatprep.subr.bf16.mxu0 0
        %1088 = vmatpush1.bf16.xpose.msra.mxu0 0
        %1089 = vmatprep.subr.bf16.mxu0 0
        %1090 = vmatpush1.bf16.xpose.msra.mxu0 0
        %1091 = vmatprep.subr.bf16.mxu0 0
        %1092 = vmatpush1.bf16.xpose.msra.mxu0 0
        %1093 = vmatprep.subr.bf16.mxu0 0
        %1094 = vmatpush1.bf16.xpose.msra.mxu0 0
        %1095 = vmatprep.subr.bf16.mxu0 0
        %1096 = vmatpush1.bf16.xpose.msra.mxu0 0
        %1097 = vmatprep.subr.bf16.mxu0 0
        %1098 = vmatpush1.bf16.xpose.msra.mxu0 0
        %1099 = vmatprep.subr.bf16.mxu0 0
        %1100 = vmatpush1.bf16.xpose.msra.mxu0 0
        %1101 = vmatprep.subr.bf16.mxu0 0
        %1102 = vmatpush1.bf16.xpose.msra.mxu0 0
        %1103 = vmatprep.subr.bf16.mxu0 0
        %1104 = vmatpush1.bf16.xpose.msra.mxu0 0
        %1105 = vmatprep.subr.bf16.mxu0 0
        %1106 = vmatpush1.bf16.xpose.msra.mxu0 0
        %1107 = vmatprep.subr.bf16.mxu0 0
        %1108 = vmatpush1.bf16.xpose.msra.mxu0 0
        %1109 = vmatprep.mubr.bf16.mxu0 0
        %1110 = vmatmul.mubr.bf16.gmra.mrb[0].mxu0 %v1072
        %v1111 = vpop.f32.mrb[0].mxu0
        %v1112 = vadd.f32 %v830, %v1111
        %v1113 = vpop.f32.mrb[0].mxu0
        %v1114 = vpop.f32.mrb[0].mxu0
        %v1115 = vpop.f32.mrb[0].mxu0
        %1116 = vdwg.mxu0
        %v1117 = vsel %vm832, %v1112, -inf
        %1118 = vmax.xlane.f32.xlu0 %v1117
        %v1119 = vpop.xlane.xlu0 %1118
        %v1120 = vsub.f32 %v1112, %v1119
        %v1121 = vmul.f32 %v1120, 1.442695
        %v1122 = vpow.pop %v1121
        %v1123 = vsel %vm832, %v1122, 0.0
        %1124 = vadd.xlane.f32.xlu0 %v1123
        %v1125 = vpop.xlane.xlu0 %1124
        %v1126 = vrcp.pop %v1125
        %v1127 = vmul.f32 %v1122, %v1126
        %v1128 = vpack.c.bf16 %v1127, %v1127
        %1129 = vrot.lane.b32.xlu0 %v1009, 112
        %v1130 = vpop.permute.xlu0 %1129
        %v1132 = vsel %vm832, %v1128, 0
        %v1135 = vsel %vm894, %v1130, 0
        %1137 = vmatprep.subr.bf16.mxu0 0
        %1138 = vmatpush1.bf16.msra.mxu0 %v1135
        %1139 = vmatprep.subr.bf16.mxu0 0
        %1140 = vmatpush1.bf16.msra.mxu0 0
        %1141 = vmatprep.subr.bf16.mxu0 0
        %1142 = vmatpush1.bf16.msra.mxu0 0
        %1143 = vmatprep.subr.bf16.mxu0 0
        %1144 = vmatpush1.bf16.msra.mxu0 0
        %1145 = vmatprep.subr.bf16.mxu0 0
        %1146 = vmatpush1.bf16.msra.mxu0 0
        %1147 = vmatprep.subr.bf16.mxu0 0
        %1148 = vmatpush1.bf16.msra.mxu0 0
        %1149 = vmatprep.subr.bf16.mxu0 0
        %1150 = vmatpush1.bf16.msra.mxu0 0
        %1151 = vmatprep.subr.bf16.mxu0 0
        %1152 = vmatpush1.bf16.msra.mxu0 0
        %1153 = vmatprep.subr.bf16.mxu0 0
        %1154 = vmatpush1.bf16.msra.mxu0 0
        %1155 = vmatprep.subr.bf16.mxu0 0
        %1156 = vmatpush1.bf16.msra.mxu0 0
        %1157 = vmatprep.subr.bf16.mxu0 0
        %1158 = vmatpush1.bf16.msra.mxu0 0
        %1159 = vmatprep.subr.bf16.mxu0 0
        %1160 = vmatpush1.bf16.msra.mxu0 0
        %1161 = vmatprep.subr.bf16.mxu0 0
        %1162 = vmatpush1.bf16.msra.mxu0 0
        %1163 = vmatprep.subr.bf16.mxu0 0
        %1164 = vmatpush1.bf16.msra.mxu0 0
        %1165 = vmatprep.subr.bf16.mxu0 0
        %1166 = vmatpush1.bf16.msra.mxu0 0
        %1167 = vmatprep.subr.bf16.mxu0 0
        %1168 = vmatpush1.bf16.msra.mxu0 0
        %1169 = vmatprep.mubr.bf16.mxu0 0
        %1170 = vmatmul.mubr.bf16.gmra.mrb[0].mxu0 %v1132
        %v1171 = vpop.f32.mrb[0].mxu0
        %v1172 = vadd.f32 0.0, %v1171
        %v1173 = vpop.f32.mrb[0].mxu0
        %v1174 = vpop.f32.mrb[0].mxu0
        %v1175 = vpop.f32.mrb[0].mxu0
        %1176 = vdwg.mxu0
        %v1177 = vpack.c.bf16 %v1172, %v1172
        %v1179 = vunpack.c.l.b16 %v1177
        %v1180 = vpack.c.b16 %v1179, %v1179
        %1181 = vrot.lane.b32.xlu0 %v1180, 16
        %v1182 = vpop.permute.xlu0 %1181
        %vm1184 = vcmask 191616
        %1185 = vst.msk [vmem:[#allocation5] sm:$0xf] %vm1184, %v1182
        %1186 = vrot.lane.b32.xlu0 %v820, 104
        %v1187 = vpop.permute.xlu0 %1186
        %1188 = vrot.lane.b32.xlu0 %v946, 104
        %v1189 = vpop.permute.xlu0 %1188
        %v1191 = vsel %vm832, %v1187, 0
        %v1194 = vsel %vm832, %v1189, 0
        %1196 = vmatprep.subr.bf16.mxu0 0
        %1197 = vmatpush1.bf16.xpose.msra.mxu0 %v1194
        %1198 = vmatprep.subr.bf16.mxu0 0
        %1199 = vmatpush1.bf16.xpose.msra.mxu0 0
        %1200 = vmatprep.subr.bf16.mxu0 0
        %1201 = vmatpush1.bf16.xpose.msra.mxu0 0
        %1202 = vmatprep.subr.bf16.mxu0 0
        %1203 = vmatpush1.bf16.xpose.msra.mxu0 0
        %1204 = vmatprep.subr.bf16.mxu0 0
        %1205 = vmatpush1.bf16.xpose.msra.mxu0 0
        %1206 = vmatprep.subr.bf16.mxu0 0
        %1207 = vmatpush1.bf16.xpose.msra.mxu0 0
        %1208 = vmatprep.subr.bf16.mxu0 0
        %1209 = vmatpush1.bf16.xpose.msra.mxu0 0
        %1210 = vmatprep.subr.bf16.mxu0 0
        %1211 = vmatpush1.bf16.xpose.msra.mxu0 0
        %1212 = vmatprep.subr.bf16.mxu0 0
        %1213 = vmatpush1.bf16.xpose.msra.mxu0 0
        %1214 = vmatprep.subr.bf16.mxu0 0
        %1215 = vmatpush1.bf16.xpose.msra.mxu0 0
        %1216 = vmatprep.subr.bf16.mxu0 0
        %1217 = vmatpush1.bf16.xpose.msra.mxu0 0
        %1218 = vmatprep.subr.bf16.mxu0 0
        %1219 = vmatpush1.bf16.xpose.msra.mxu0 0
        %1220 = vmatprep.subr.bf16.mxu0 0
        %1221 = vmatpush1.bf16.xpose.msra.mxu0 0
        %1222 = vmatprep.subr.bf16.mxu0 0
        %1223 = vmatpush1.bf16.xpose.msra.mxu0 0
        %1224 = vmatprep.subr.bf16.mxu0 0
        %1225 = vmatpush1.bf16.xpose.msra.mxu0 0
        %1226 = vmatprep.subr.bf16.mxu0 0
        %1227 = vmatpush1.bf16.xpose.msra.mxu0 0
        %1228 = vmatprep.mubr.bf16.mxu0 0
        %1229 = vmatmul.mubr.bf16.gmra.mrb[0].mxu0 %v1191
        %v1230 = vpop.f32.mrb[0].mxu0
        %v1231 = vadd.f32 %v830, %v1230
        %v1232 = vpop.f32.mrb[0].mxu0
        %v1233 = vpop.f32.mrb[0].mxu0
        %v1234 = vpop.f32.mrb[0].mxu0
        %1235 = vdwg.mxu0
        %v1236 = vsel %vm832, %v1231, -inf
        %1237 = vmax.xlane.f32.xlu0 %v1236
        %v1238 = vpop.xlane.xlu0 %1237
        %v1239 = vsub.f32 %v1231, %v1238
        %v1240 = vmul.f32 %v1239, 1.442695
        %v1241 = vpow.pop %v1240
        %v1242 = vsel %vm832, %v1241, 0.0
        %1243 = vadd.xlane.f32.xlu0 %v1242
        %v1244 = vpop.xlane.xlu0 %1243
        %v1245 = vrcp.pop %v1244
        %v1246 = vmul.f32 %v1241, %v1245
        %v1247 = vpack.c.bf16 %v1246, %v1246
        %1248 = vrot.lane.b32.xlu0 %v1009, 104
        %v1249 = vpop.permute.xlu0 %1248
        %v1251 = vsel %vm832, %v1247, 0
        %v1254 = vsel %vm894, %v1249, 0
        %1256 = vmatprep.subr.bf16.mxu0 0
        %1257 = vmatpush1.bf16.msra.mxu0 %v1254
        %1258 = vmatprep.subr.bf16.mxu0 0
        %1259 = vmatpush1.bf16.msra.mxu0 0
        %1260 = vmatprep.subr.bf16.mxu0 0
        %1261 = vmatpush1.bf16.msra.mxu0 0
        %1262 = vmatprep.subr.bf16.mxu0 0
        %1263 = vmatpush1.bf16.msra.mxu0 0
        %1264 = vmatprep.subr.bf16.mxu0 0
        %1265 = vmatpush1.bf16.msra.mxu0 0
        %1266 = vmatprep.subr.bf16.mxu0 0
        %1267 = vmatpush1.bf16.msra.mxu0 0
        %1268 = vmatprep.subr.bf16.mxu0 0
        %1269 = vmatpush1.bf16.msra.mxu0 0
        %1270 = vmatprep.subr.bf16.mxu0 0
        %1271 = vmatpush1.bf16.msra.mxu0 0
        %1272 = vmatprep.subr.bf16.mxu0 0
        %1273 = vmatpush1.bf16.msra.mxu0 0
        %1274 = vmatprep.subr.bf16.mxu0 0
        %1275 = vmatpush1.bf16.msra.mxu0 0
        %1276 = vmatprep.subr.bf16.mxu0 0
        %1277 = vmatpush1.bf16.msra.mxu0 0
        %1278 = vmatprep.subr.bf16.mxu0 0
        %1279 = vmatpush1.bf16.msra.mxu0 0
        %1280 = vmatprep.subr.bf16.mxu0 0
        %1281 = vmatpush1.bf16.msra.mxu0 0
        %1282 = vmatprep.subr.bf16.mxu0 0
        %1283 = vmatpush1.bf16.msra.mxu0 0
        %1284 = vmatprep.subr.bf16.mxu0 0
        %1285 = vmatpush1.bf16.msra.mxu0 0
        %1286 = vmatprep.subr.bf16.mxu0 0
        %1287 = vmatpush1.bf16.msra.mxu0 0
        %1288 = vmatprep.mubr.bf16.mxu0 0
        %1289 = vmatmul.mubr.bf16.gmra.mrb[0].mxu0 %v1251
        %v1290 = vpop.f32.mrb[0].mxu0
        %v1291 = vadd.f32 0.0, %v1290
        %v1292 = vpop.f32.mrb[0].mxu0
        %v1293 = vpop.f32.mrb[0].mxu0
        %v1294 = vpop.f32.mrb[0].mxu0
        %1295 = vdwg.mxu0
        %v1296 = vpack.c.bf16 %v1291, %v1291
        %v1298 = vunpack.c.l.b16 %v1296
        %v1299 = vpack.c.b16 %v1298, %v1298
        %1300 = vrot.lane.b32.xlu0 %v1299, 24
        %v1301 = vpop.permute.xlu0 %1300
        %vm1303 = vcmask 257216
        %1304 = vst.msk [vmem:[#allocation5] sm:$0xf] %vm1303, %v1301
        %v1305 = vld [vmem:[#allocation5] sm:$0xf]
        %v1306 = vld [vmem:[#allocation14] sm:$0xf]
        %v1307 = vld [vmem:[#allocation14 + $0x4] sm:$0xf]
        %v1308 = vld [vmem:[#allocation14 + $0x8] sm:$0xf]
        %v1309 = vld [vmem:[#allocation14 + $0xc] sm:$0xf]
        %v1310 = vld [vmem:[#allocation15] sm:$0x1]
        %v1312 = vlaneseq
        %v1313 = vshrl.u32 %v1312, 7
        %v1314 = vsub.s32 0, %v1313
        %v1315 = vrot.slane %v1310, %v1314
        %v1321 = vunpack.c.l.b16 %v1306
        %v1322 = vunpack.c.l.b16 %v1307
        %v1323 = vunpack.c.l.b16 %v1308
        %v1324 = vunpack.c.l.b16 %v1309
        %v1325 = vpack.c.b16 %v1322, %v1321
        %v1326 = vpack.c.b16 %v1324, %v1323
        %v1330 = vsel %vm776, %v1305, 0
        %1332 = vmatprep.subr.bf16.mxu0 0
        %1333 = vmatpush1.bf16.msra.mxu0 %v1325
        %1334 = vmatprep.subr.bf16.mxu0 0
        %1335 = vmatpush1.bf16.msra.mxu0 %v1326
        %1336 = vmatprep.subr.bf16.mxu0 0
        %1337 = vmatpush1.bf16.msra.mxu0 0
        %1338 = vmatprep.subr.bf16.mxu0 0
        %1339 = vmatpush1.bf16.msra.mxu0 0
        %1340 = vmatprep.subr.bf16.mxu0 0
        %1341 = vmatpush1.bf16.msra.mxu0 0
        %1342 = vmatprep.subr.bf16.mxu0 0
        %1343 = vmatpush1.bf16.msra.mxu0 0
        %1344 = vmatprep.subr.bf16.mxu0 0
        %1345 = vmatpush1.bf16.msra.mxu0 0
        %1346 = vmatprep.subr.bf16.mxu0 0
        %1347 = vmatpush1.bf16.msra.mxu0 0
        %1348 = vmatprep.subr.bf16.mxu0 0
        %1349 = vmatpush1.bf16.msra.mxu0 0
        %1350 = vmatprep.subr.bf16.mxu0 0
        %1351 = vmatpush1.bf16.msra.mxu0 0
        %1352 = vmatprep.subr.bf16.mxu0 0
        %1353 = vmatpush1.bf16.msra.mxu0 0
        %1354 = vmatprep.subr.bf16.mxu0 0
        %1355 = vmatpush1.bf16.msra.mxu0 0
        %1356 = vmatprep.subr.bf16.mxu0 0
        %1357 = vmatpush1.bf16.msra.mxu0 0
        %1358 = vmatprep.subr.bf16.mxu0 0
        %1359 = vmatpush1.bf16.msra.mxu0 0
        %1360 = vmatprep.subr.bf16.mxu0 0
        %1361 = vmatpush1.bf16.msra.mxu0 0
        %1362 = vmatprep.subr.bf16.mxu0 0
        %1363 = vmatpush1.bf16.msra.mxu0 0
        %1364 = vmatprep.mubr.bf16.mxu0 0
        %1365 = vmatmul.mubr.bf16.gmra.mrb[0].mxu0 %v1330
        %v1366 = vpop.f32.mrb[0].mxu0
        %v1367 = vadd.f32 %v1315, %v1366
        %v1368 = vpop.f32.mrb[0].mxu0
        %v1369 = vpop.f32.mrb[0].mxu0
        %v1370 = vpop.f32.mrb[0].mxu0
        %1371 = vdwg.mxu0
        %v1372 = vadd.f32 %v747, %v1367
        %v1373 = vld [vmem:[%s10] sm:$0x1]
        %v1374 = vld [vmem:[%s11] sm:$0x1]
        %v1375 = vsel %vm776, %v1372, 0.0
        %1376 = vadd.xlane.f32.xlu0 %v1375
        %v1377 = vpop.xlane.xlu0 %1376
        %v1378 = vrcp.pop 32.0
        %v1379 = vmul.f32 %v1377, %v1378
        %v1380 = vsub.f32 %v1372, %v1379
        %v1381 = vmul.f32 %v1380, %v1380
        %v1382 = vsel %vm776, %v1381, 0.0
        %1383 = vadd.xlane.f32.xlu0 %v1382
        %v1384 = vpop.xlane.xlu0 %1383
        %v1385 = vmul.f32 %v1384, 0.032258064
        %v1386 = vrsqrt.pop %v1385
        %v1387 = vmul.f32 %v1385, %v1386
        %vm1388 = vcmp.eq.f32.partialorder %v1385, inf
        %v1389 = vsel %vm1388, %v1385, %v1387
        %vm1390 = vcmp.eq.f32.partialorder %v1385, 0.0
        %v1391 = vand.u32 %v1385, 2147483648
        %v1392 = vsel %vm1390, %v1391, %v1389
        %v1393 = vadd.f32 %v1392, 1e-06
        %v1394 = vrcp.pop %v1393
        %v1396 = vlaneseq
        %v1397 = vshrl.u32 %v1396, 7
        %v1398 = vsub.s32 0, %v1397
        %v1399 = vrot.slane %v1373, %v1398
        %v1401 = vmul.f32 %v1399, %v1380
        %v1402 = vmul.f32 %v1401, %v1394
        %v1404 = vlaneseq
        %v1405 = vshrl.u32 %v1404, 7
        %v1406 = vsub.s32 0, %v1405
        %v1407 = vrot.slane %v1374, %v1406
        %v1409 = vadd.f32 %v1402, %v1407
        %v1410 = vpack.c.bf16 %v1409, %v1409
        %v1411 = vld [vmem:[%s12] sm:$0xf]
        %v1412 = vld [vmem:[%s12 + $0x4] sm:$0xf]
        %v1413 = vld [vmem:[%s12 + $0x8] sm:$0xf]
        %v1414 = vld [vmem:[%s12 + $0xc] sm:$0xf]
        %v1415 = vld [vmem:[%s13] sm:$0x1]
        %v1417 = vlaneseq
        %v1418 = vshrl.u32 %v1417, 7
        %v1419 = vsub.s32 0, %v1418
        %v1420 = vrot.slane %v1415, %v1419
        %v1426 = vunpack.c.l.b16 %v1411
        %v1427 = vunpack.c.l.b16 %v1412
        %v1428 = vunpack.c.l.b16 %v1413
        %v1429 = vunpack.c.l.b16 %v1414
        %v1430 = vpack.c.b16 %v1427, %v1426
        %v1431 = vpack.c.b16 %v1429, %v1428
        %v1435 = vsel %vm776, %v1410, 0
        %1437 = vmatprep.subr.bf16.mxu0 0
        %1438 = vmatpush1.bf16.msra.mxu0 %v1430
        %1439 = vmatprep.subr.bf16.mxu0 0
        %1440 = vmatpush1.bf16.msra.mxu0 %v1431
        %1441 = vmatprep.subr.bf16.mxu0 0
        %1442 = vmatpush1.bf16.msra.mxu0 0
        %1443 = vmatprep.subr.bf16.mxu0 0
        %1444 = vmatpush1.bf16.msra.mxu0 0
        %1445 = vmatprep.subr.bf16.mxu0 0
        %1446 = vmatpush1.bf16.msra.mxu0 0
        %1447 = vmatprep.subr.bf16.mxu0 0
        %1448 = vmatpush1.bf16.msra.mxu0 0
        %1449 = vmatprep.subr.bf16.mxu0 0
        %1450 = vmatpush1.bf16.msra.mxu0 0
        %1451 = vmatprep.subr.bf16.mxu0 0
        %1452 = vmatpush1.bf16.msra.mxu0 0
        %1453 = vmatprep.subr.bf16.mxu0 0
        %1454 = vmatpush1.bf16.msra.mxu0 0
        %1455 = vmatprep.subr.bf16.mxu0 0
        %1456 = vmatpush1.bf16.msra.mxu0 0
        %1457 = vmatprep.subr.bf16.mxu0 0
        %1458 = vmatpush1.bf16.msra.mxu0 0
        %1459 = vmatprep.subr.bf16.mxu0 0
        %1460 = vmatpush1.bf16.msra.mxu0 0
        %1461 = vmatprep.subr.bf16.mxu0 0
        %1462 = vmatpush1.bf16.msra.mxu0 0
        %1463 = vmatprep.subr.bf16.mxu0 0
        %1464 = vmatpush1.bf16.msra.mxu0 0
        %1465 = vmatprep.subr.bf16.mxu0 0
        %1466 = vmatpush1.bf16.msra.mxu0 0
        %1467 = vmatprep.subr.bf16.mxu0 0
        %1468 = vmatpush1.bf16.msra.mxu0 0
        %1469 = vmatprep.mubr.bf16.mxu0 0
        %1470 = vmatmul.mubr.bf16.gmra.mrb[0].mxu0 %v1435
        %v1471 = vpop.f32.mrb[0].mxu0
        %v1472 = vadd.f32 %v1420, %v1471
        %v1473 = vpop.f32.mrb[0].mxu0
        %v1474 = vpop.f32.mrb[0].mxu0
        %v1475 = vpop.f32.mrb[0].mxu0
        %1476 = vdwg.mxu0
        %v1477 = vmax.f32 %v1472, 0.0
        %v1478 = vpack.c.bf16 %v1477, %v1477
        %v1479 = vld [vmem:[%s14] sm:$0xf]
        %v1480 = vld [vmem:[%s14 + $0x4] sm:$0xf]
        %v1481 = vld [vmem:[%s14 + $0x8] sm:$0xf]
        %v1482 = vld [vmem:[%s14 + $0xc] sm:$0xf]
        %v1483 = vld [vmem:[%s14 + $0x10] sm:$0xf]
        %v1484 = vld [vmem:[%s14 + $0x14] sm:$0xf]
        %v1485 = vld [vmem:[%s14 + $0x18] sm:$0xf]
        %v1486 = vld [vmem:[%s14 + $0x1c] sm:$0xf]
        %v1487 = vld [vmem:[%s15] sm:$0x1]
        %v1489 = vlaneseq
        %v1490 = vshrl.u32 %v1489, 7
        %v1491 = vsub.s32 0, %v1490
        %v1492 = vrot.slane %v1487, %v1491
        %v1502 = vunpack.c.l.b16 %v1479
        %v1503 = vunpack.c.l.b16 %v1480
        %v1504 = vunpack.c.l.b16 %v1481
        %v1505 = vunpack.c.l.b16 %v1482
        %v1506 = vunpack.c.l.b16 %v1483
        %v1507 = vunpack.c.l.b16 %v1484
        %v1508 = vunpack.c.l.b16 %v1485
        %v1509 = vunpack.c.l.b16 %v1486
        %v1510 = vpack.c.b16 %v1503, %v1502
        %v1511 = vpack.c.b16 %v1505, %v1504
        %v1512 = vpack.c.b16 %v1507, %v1506
        %v1513 = vpack.c.b16 %v1509, %v1508
        %vm1518 = vcmask 523264
        %v1520 = vsel %vm1518, %v1478, 0
        %1522 = vmatprep.subr.bf16.mxu0 0
        %1523 = vmatpush1.bf16.msra.mxu0 %v1510
        %1524 = vmatprep.subr.bf16.mxu0 0
        %1525 = vmatpush1.bf16.msra.mxu0 %v1511
        %1526 = vmatprep.subr.bf16.mxu0 0
        %1527 = vmatpush1.bf16.msra.mxu0 %v1512
        %1528 = vmatprep.subr.bf16.mxu0 0
        %1529 = vmatpush1.bf16.msra.mxu0 %v1513
        %1530 = vmatprep.subr.bf16.mxu0 0
        %1531 = vmatpush1.bf16.msra.mxu0 0
        %1532 = vmatprep.subr.bf16.mxu0 0
        %1533 = vmatpush1.bf16.msra.mxu0 0
        %1534 = vmatprep.subr.bf16.mxu0 0
        %1535 = vmatpush1.bf16.msra.mxu0 0
        %1536 = vmatprep.subr.bf16.mxu0 0
        %1537 = vmatpush1.bf16.msra.mxu0 0
        %1538 = vmatprep.subr.bf16.mxu0 0
        %1539 = vmatpush1.bf16.msra.mxu0 0
        %1540 = vmatprep.subr.bf16.mxu0 0
        %1541 = vmatpush1.bf16.msra.mxu0 0
        %1542 = vmatprep.subr.bf16.mxu0 0
        %1543 = vmatpush1.bf16.msra.mxu0 0
        %1544 = vmatprep.subr.bf16.mxu0 0
        %1545 = vmatpush1.bf16.msra.mxu0 0
        %1546 = vmatprep.subr.bf16.mxu0 0
        %1547 = vmatpush1.bf16.msra.mxu0 0
        %1548 = vmatprep.subr.bf16.mxu0 0
        %1549 = vmatpush1.bf16.msra.mxu0 0
        %1550 = vmatprep.subr.bf16.mxu0 0
        %1551 = vmatpush1.bf16.msra.mxu0 0
        %1552 = vmatprep.subr.bf16.mxu0 0
        %1553 = vmatpush1.bf16.msra.mxu0 0
        %1554 = vmatprep.mubr.bf16.mxu0 0
        %1555 = vmatmul.mubr.bf16.gmra.mrb[0].mxu0 %v1520
        %v1556 = vpop.f32.mrb[0].mxu0
        %v1557 = vadd.f32 %v1492, %v1556
        %v1558 = vpop.f32.mrb[0].mxu0
        %v1559 = vpop.f32.mrb[0].mxu0
        %v1560 = vpop.f32.mrb[0].mxu0
        %1561 = vdwg.mxu0
        %v1562 = vadd.f32 %v1372, %v1557
        %1563 = vst.msk [vmem:[%s615] sm:$0xff] %vm776, %v1562
        %s1564 = sand.u32 %s402, 1
        %s1565 = scalar_lea.sflag [#allocation8], %s1564
        %s1566 = sand.u32 %s402, 1
        %s1567 = smul.addr %s1566, 8
        %s1568 = scalar_lea.vmem [#allocation17], %s1567
        // Predicated region
        $region113: #{tpu_custom_call.1} parent=83 // pred_check
          %p1569 = pneg %p412
        $region114: #{tpu_custom_call.1} parent=83 // pred_check_branch
          %1571 = sbr.rel (%p1569) target = $region116
        $region115: #{tpu_custom_call.1} parent=83 // pred_region
          %s1573 = ssub.s32 128, 128
          %1574 = vsyncadd %s1565, %s1573
          %s1575 = sadd.s32 %s39, %s38
          %s1576 = smul.addr %s1575, 128
          %s1577 = scalar_lea.hbm %s16, %s1576
          %s1579 = sshll.u32 %s1568, 4
          %s1580 = int_to_ptr.vmem [resolvable:$true] %s1579
          %1582 = dma.vmem_to_hbm [thread:$0]  %s1580, 128, %s1577, %s1565
        $region116: #{tpu_custom_call.1} parent=83 // pred_fallthru
          _
      $region84: #{tpu_custom_call.1} parent=5 // pred_fallthru
        _
      %p1583 = scmp.le.s32.totalorder 2, %s29
      // Predicated region
      $region117: #{tpu_custom_call.1} parent=5 // pred_check
        %p1584 = pneg %p1583
      $region118: #{tpu_custom_call.1} parent=5 // pred_check_branch
        %1586 = sbr.rel (%p1584) target = $region120
      $region119: #{tpu_custom_call.1} parent=5 // pred_region
        %s1587 = ssub.s32 %s29, 2
        // Predicated region
        $region121: #{tpu_custom_call.1} parent=119 // pred_check
          %p1588 = pneg %p418
        $region122: #{tpu_custom_call.1} parent=119 // pred_check_branch
          %1590 = sbr.rel (%p1588) target = $region124
        $region123: #{tpu_custom_call.1} parent=119 // pred_region
          %s1591 = sand.u32 %s403, 1
          %s1592 = scalar_lea.sflag [#allocation8], %s1591
          %s1593 = sand.u32 %s403, 1
          %s1594 = smul.addr %s1593, 8
          %s1595 = scalar_lea.vmem [#allocation17], %s1594
          %1596 = dma.done %s1592, 128
        $region124: #{tpu_custom_call.1} parent=119 // pred_fallthru
          _
      $region120: #{tpu_custom_call.1} parent=5 // pred_fallthru
        _
    $region6: #{tpu_custom_call.1} parent=1 // loop_footer
      %s33 = sadd.s32 1, %s29
    $region7: #{tpu_custom_call.1} parent=1 // loop_footer_branch
      %28 = sbr.rel target = $region3
    $region8: #{tpu_custom_call.1} parent=1 // loop_exit
      _
    %1597 = vsyncpa [#allocation7], 1
    %s1598 = scalar_lea.sflag [#allocation7], 1
    %1599 = vsyncpa %s1598, 1
    %1600 = vsyncpa [#allocation10], 1
    %1601 = vsyncpa [#allocation13], 1
    %1602 = vsyncpa [#allocation16], 1
    %1603 = vsyncpa [#allocation8], 1
    %s1604 = scalar_lea.sflag [#allocation8], 1
    %1605 = vsyncpa %s1604, 1

</llo_original>
